<compile_context>
chip_gen: v6e
topology: v6e:2x2x1
jax: 0.10.0
libtpu: 0.0.40
codegen_flags: <defaults>
</compile_context>

<pallas_src>
import functools

import jax
import jax.numpy as jnp
from jax.experimental import pallas as pl
from jax.experimental.pallas import tpu as pltpu


# ----------------------------------------------------------------------------
# Pallas kernel: single-block  Out = [relu]( W @ P + bias [+ residual] )
# ----------------------------------------------------------------------------
def _mm_kernel(*refs, has_bias, has_res, relu):
    w_ref, p_ref = refs[0], refs[1]
    o_ref = refs[-1]
    acc = jnp.dot(w_ref[...], p_ref[...], preferred_element_type=jnp.float32)
    idx = 2
    if has_bias:
        acc = acc + refs[idx][...]          # (OC, 1) broadcast over lanes
        idx += 1
    if has_res:
        acc = acc + refs[idx][...]          # (OC, M) residual
        idx += 1
    if relu:
        acc = jnp.maximum(acc, 0.0)
    o_ref[...] = acc.astype(o_ref.dtype)


def matmul_fused(w, p, bias=None, residual=None, relu=False):
    """w: (OC, K), p: (K, M) -> (OC, M); optional bias (OC,), residual (OC, M), ReLU."""
    w = w.astype(jnp.float32)
    p = p.astype(jnp.float32)
    oc = w.shape[0]
    m = p.shape[1]
    args = [w, p]
    if bias is not None:
        args.append(bias.astype(jnp.float32).reshape(oc, 1))
    if residual is not None:
        args.append(residual.astype(jnp.float32).reshape(oc, m))
    kernel = functools.partial(_mm_kernel,
                               has_bias=bias is not None,
                               has_res=residual is not None,
                               relu=relu)
    vmem = pl.BlockSpec(memory_space=pltpu.MemorySpace.VMEM)
    # Single block, no grid: whole problem (<1 MB) is VMEM resident; lane axis
    # is the big N*OH*OW dim -> lane-dense stores, no pipeline-step overhead.
    return pl.pallas_call(
        kernel,
        out_shape=jax.ShapeDtypeStruct((oc, m), jnp.float32),
        in_specs=[vmem] * len(args),
        out_specs=vmem,
    )(*args)


# ----------------------------------------------------------------------------
# Conv glue (host JAX): channel-major (C, N, H, W) layout end-to-end.
# ----------------------------------------------------------------------------
def _extract_patches_cnhw(x, kh, kw, stride):
    """x: (C, N, H, W) already padded -> ((C*KH*KW, N*OH*OW), oh, ow)."""
    c, n, h, w = x.shape
    oh = (h - kh) // stride + 1
    ow = (w - kw) // stride + 1
    taps = []
    for di in range(kh):
        for dj in range(kw):
            taps.append(x[:, :,
                          di:di + stride * (oh - 1) + 1:stride,
                          dj:dj + stride * (ow - 1) + 1:stride])
    p = jnp.stack(taps, axis=1)                      # (C, KH*KW, N, OH, OW)
    return p.reshape(c * kh * kw, n * oh * ow), oh, ow


def conv2d_cnhw(x, w, b, stride=1, relu=False, residual=None):
    """x: (C, N, H, W) (pre-padded); w: (OC, IC, KH, KW) -> (OC, N, OH, OW)."""
    n = x.shape[1]
    oc, ic, kh, kw = w.shape
    p, oh, ow = _extract_patches_cnhw(x, kh, kw, stride)
    wmat = w.reshape(oc, ic * kh * kw)
    res = None if residual is None else residual.reshape(oc, n * oh * ow)
    out = matmul_fused(wmat, p, b, residual=res, relu=relu)   # (OC, N*OH*OW)
    return out.reshape(oc, n, oh, ow)


def same_pad_cnhw(x, k, s):
    """TF-SAME asymmetric zero padding (Conv2dSamePad) on (C, N, H, W)."""
    _, _, h, w = x.shape
    oh = -(-h // s)
    ow = -(-w // s)
    ph = max((oh - 1) * s + k - h, 0)
    pw = max((ow - 1) * s + k - w, 0)
    return jnp.pad(x, ((0, 0), (0, 0),
                       (ph // 2, ph - ph // 2),
                       (pw // 2, pw - pw // 2)))


def _flip_swap(w):
    """ConvTranspose2d weight (IC, OC, KH, KW) -> equivalent conv weight (OC, IC, KH, KW)."""
    return jnp.transpose(w[:, :, ::-1, ::-1], (1, 0, 2, 3))


def conv_transpose2d_same_cnhw(x, w, b, stride, relu=False, residual=None):
    """PyTorch ConvTranspose2d(stride, padding=0) followed by the
    ConvTranspose2dSamePad(k, stride) crop, expressed as a single ordinary
    conv (flipped / channel-swapped kernel, asymmetric pad).  For stride 1 no
    dilation and no crop op is materialized."""
    ic, oc, kh, kw = w.shape
    w_conv = _flip_swap(w)
    c, n, h, wd = x.shape
    if stride == 1:
        ct_h, ct_w = (kh - 1) // 2, (kw - 1) // 2            # crop top/left
        cb_h, cb_w = (kh - 1) - ct_h, (kw - 1) - ct_w        # crop bottom/right
        xp = jnp.pad(x, ((0, 0), (0, 0), (cb_h, ct_h), (cb_w, ct_w)))
    else:
        hd, wdd = (h - 1) * stride + 1, (wd - 1) * stride + 1
        xd = jnp.zeros((c, n, hd, wdd), x.dtype).at[:, :, ::stride, ::stride].set(x)
        # TODO(synk): this zero-dilation could be removed with a sub-pixel
        # (phase) decomposition; kept since only 2 tiny stride-2 deconvs use it.
        ct_h, ct_w = (kh - stride) // 2, (kw - stride) // 2
        cb_h = (kh - stride) - ct_h
        cb_w = (kw - stride) - ct_w
        xp = jnp.pad(xd, ((0, 0), (0, 0),
                          (kh - 1 - ct_h, kh - 1 - cb_h),
                          (kw - 1 - ct_w, kw - 1 - cb_w)))
    return conv2d_cnhw(xp, w_conv, b, 1, relu=relu, residual=residual)


def eca_cnhw(x, w3):
    """ECA: GAP over H,W -> k=3 1-D conv over channels -> sigmoid gate."""
    y = x.mean(axis=(2, 3))                              # (C, N)
    yp = jnp.pad(y, ((1, 1), (0, 0)))
    yc = w3[0] * yp[:-2] + w3[1] * yp[1:-1] + w3[2] * yp[2:]
    return x * jax.nn.sigmoid(yc)[:, :, None, None]


def _embed5(w):
    """Zero-embed an (OC, IC, k, k) kernel (k in {1,3,5}) into a centered 5x5."""
    oc, ic, kh, kw = w.shape
    oh, ow = (5 - kh) // 2, (5 - kw) // 2
    return jnp.zeros((oc, ic, 5, 5), w.dtype).at[:, :, oh:oh + kh, ow:ow + kw].set(w)


# ----------------------------------------------------------------------------
# Deterministic parameter init (shapes from RIABConvAE_Coil20.__init__).
# ----------------------------------------------------------------------------
def init_params(key):
    def nxt():
        nonlocal key
        key, sub = jax.random.split(key)
        return sub

    def conv_w(oc, ic, kh, kw):
        return 0.1 * jax.random.normal(nxt(), (oc, ic, kh, kw), jnp.float32)

    def deconv_w(ic, oc, kh, kw):
        return 0.1 * jax.random.normal(nxt(), (ic, oc, kh, kw), jnp.float32)

    def bias(c):
        return 0.01 * jax.random.normal(nxt(), (c,), jnp.float32)

    p = {}
    # encoder
    p['enc_conv1_w'] = conv_w(6, 1, 3, 3); p['enc_conv1_b'] = bias(6)
    p['inc_b1_w'] = conv_w(2, 6, 1, 1);    p['inc_b1_b'] = bias(2)
    p['inc_b2_w'] = conv_w(2, 6, 3, 3);    p['inc_b2_b'] = bias(2)
    p['inc_b3_w'] = conv_w(2, 6, 5, 5);    p['inc_b3_b'] = bias(2)
    p['eca_enc_w'] = 0.1 * jax.random.normal(nxt(), (3,), jnp.float32)
    p['res_c1_w'] = conv_w(6, 6, 2, 2);    p['res_c1_b'] = bias(6)
    p['res_c2_w'] = conv_w(6, 6, 3, 3);    p['res_c2_b'] = bias(6)
    p['enc_conv4_w'] = conv_w(15, 6, 3, 3); p['enc_conv4_b'] = bias(15)
    # decoder
    p['dec_deconv1_w'] = deconv_w(15, 6, 3, 3); p['dec_deconv1_b'] = bias(6)
    p['tres_c1_w'] = deconv_w(6, 6, 3, 3);      p['tres_c1_b'] = bias(6)
    p['tres_c2_w'] = deconv_w(6, 6, 2, 2);      p['tres_c2_b'] = bias(6)
    p['tinc_b1_w'] = deconv_w(6, 2, 1, 1);      p['tinc_b1_b'] = bias(2)
    p['tinc_b2_w'] = deconv_w(6, 2, 3, 3);      p['tinc_b2_b'] = bias(2)
    p['tinc_b3_w'] = deconv_w(6, 2, 5, 5);      p['tinc_b3_b'] = bias(2)
    p['eca_dec_w'] = 0.1 * jax.random.normal(nxt(), (3,), jnp.float32)
    p['dec_deconv4_w'] = deconv_w(6, 1, 3, 3);  p['dec_deconv4_b'] = bias(1)
    return p


# ----------------------------------------------------------------------------
# Encoder / decoder / full forward (matches RIABNet_Coil20.forward).
# ----------------------------------------------------------------------------
def encoder(p, x):
    """x: (C=1, N, 16, 16) -> z: (15, N, 4, 4)."""
    # pad1 + conv1 (1->6, k3, s2) + relu
    h = conv2d_cnhw(same_pad_cnhw(x, 3, 2), p['enc_conv1_w'], p['enc_conv1_b'],
                    stride=2, relu=True)
    # inception block: 1x1/3x3/5x5 'same' branches fused into one 5x5 conv
    w_inc = jnp.concatenate([_embed5(p['inc_b1_w']),
                             _embed5(p['inc_b2_w']),
                             p['inc_b3_w']], axis=0)
    b_inc = jnp.concatenate([p['inc_b1_b'], p['inc_b2_b'], p['inc_b3_b']])
    h = conv2d_cnhw(same_pad_cnhw(h, 5, 1), w_inc, b_inc, 1, relu=True)
    # ECA block
    h = eca_cnhw(h, p['eca_enc_w'])
    # ResNet block (k=2 then k=3, 'same'; residual add + relu fused in 2nd conv)
    r = conv2d_cnhw(same_pad_cnhw(h, 2, 1), p['res_c1_w'], p['res_c1_b'], 1,
                    relu=True)
    h = conv2d_cnhw(same_pad_cnhw(r, 3, 1), p['res_c2_w'], p['res_c2_b'], 1,
                    relu=True, residual=h)
    # pad4 + conv4 (6->15, k3, s2) + relu
    h = conv2d_cnhw(same_pad_cnhw(h, 3, 2), p['enc_conv4_w'], p['enc_conv4_b'],
                    stride=2, relu=True)
    return h


def decoder(p, z):
    """z: (15, N, 4, 4) -> x_recon: (1, N, 16, 16)."""
    # deconv1 (15->6, k3, s2) + same-crop + relu
    h = conv_transpose2d_same_cnhw(z, p['dec_deconv1_w'], p['dec_deconv1_b'], 2,
                                   relu=True)
    # Transpose ResNet block (k=3 then k=2, stride 1, crop-to-same;
    # residual add + relu fused into the 2nd conv)
    r = conv_transpose2d_same_cnhw(h, p['tres_c1_w'], p['tres_c1_b'], 1,
                                   relu=True)
    h = conv_transpose2d_same_cnhw(r, p['tres_c2_w'], p['tres_c2_b'], 1,
                                   relu=True, residual=h)
    # Transpose inception block: stride-1 deconv+crop branches == 'same' convs
    # with flipped/channel-swapped kernels; fuse into one 5x5 conv.
    w_tinc = jnp.concatenate([_embed5(_flip_swap(p['tinc_b1_w'])),
                              _embed5(_flip_swap(p['tinc_b2_w'])),
                              _flip_swap(p['tinc_b3_w'])], axis=0)
    b_tinc = jnp.concatenate([p['tinc_b1_b'], p['tinc_b2_b'], p['tinc_b3_b']])
    h = conv2d_cnhw(same_pad_cnhw(h, 5, 1), w_tinc, b_tinc, 1, relu=True)
    # ECA block
    h = eca_cnhw(h, p['eca_dec_w'])
    # deconv4 (6->1, k3, s2) + same-crop + relu
    h = conv_transpose2d_same_cnhw(h, p['dec_deconv4_w'], p['dec_deconv4_b'], 2,
                                   relu=True)
    return h


def riabnet_forward(p, coefficient, x):
    """x: (N, 1, H, W) NCHW (PyTorch layout)."""
    n = x.shape[0]
    xc = jnp.transpose(x, (1, 0, 2, 3))                       # (C, N, H, W)
    z = encoder(p, xc)                                        # (15, N, 4, 4)
    c_, _, zh, zw = z.shape
    z_flat = jnp.transpose(z, (1, 0, 2, 3)).reshape(n, -1)    # == torch .view(n, -1)
    z_recon = matmul_fused(coefficient, z_flat)               # SelfExpression: C @ z
    z_rr = jnp.transpose(z_recon.reshape(n, c_, zh, zw), (1, 0, 2, 3))
    x_recon = decoder(p, z_rr)
    return jnp.transpose(x_recon, (1, 0, 2, 3)), z_flat, z_recon


if __name__ == "__main__":
    key = jax.random.PRNGKey(0)
    k_params, k_x = jax.random.split(key)

    n = 4                                                     # num_sample (= batch)
    x = jax.random.uniform(k_x, (n, 1, 16, 16), jnp.float32)

    params = init_params(k_params)
    coefficient = 1e-8 * jnp.ones((n, n), jnp.float32)        # SelfExpression.Coefficient

    fwd = jax.jit(riabnet_forward)
    x_recon, z, z_recon = fwd(params, coefficient, x)
    jax.block_until_ready((x_recon, z, z_recon))

    assert x_recon.shape == x.shape, x_recon.shape
    assert z.shape == (n, 15 * 4 * 4), z.shape
    assert z_recon.shape == z.shape, z_recon.shape
    print("KERNEL_OK")
</pallas_src>

<mosaic_0001>
module attributes {stable_mosaic.version = 11 : i64} {
  func.func @_mm_kernel(%arg0: memref<6x9xf32, #tpu.memory_space<vmem>>, %arg1: memref<9x256xf32, #tpu.memory_space<vmem>>, %arg2: memref<6x1xf32, #tpu.memory_space<vmem>>, %arg3: memref<6x256xf32, #tpu.memory_space<vmem>>) attributes {dimension_semantics = [], scalar_prefetch = 0 : i64, scratch_operands = 0 : i64, tpu.core_type = #tpu.core_type<tc>} {
    %c0 = arith.constant 0 : index
    %c0_0 = arith.constant 0 : index
    %0 = vector.load %arg0[%c0, %c0_0] : memref<6x9xf32, #tpu.memory_space<vmem>>, vector<6x9xf32>
    %c0_1 = arith.constant 0 : index
    %c0_2 = arith.constant 0 : index
    %1 = vector.load %arg1[%c0_1, %c0_2] : memref<9x256xf32, #tpu.memory_space<vmem>>, vector<9x256xf32>
    %cst = arith.constant dense<0.000000e+00> : vector<6x256xf32>
    %2 = tpu.matmul %0, %1, %cst {dimension_numbers = #tpu.dot_dimension_numbers<[1], [0], [0], [1], [0, 0, 1, 1], [], []>} : vector<6x9xf32>, vector<9x256xf32>, vector<6x256xf32> -> vector<6x256xf32>
    %c0_3 = arith.constant 0 : index
    %c0_4 = arith.constant 0 : index
    %3 = vector.load %arg2[%c0_3, %c0_4] : memref<6x1xf32, #tpu.memory_space<vmem>>, vector<6x1xf32>
    %4 = vector.broadcast %3 : vector<6x1xf32> to vector<6x256xf32>
    %5 = arith.addf %2, %4 : vector<6x256xf32>
    %cst_5 = arith.constant 0.000000e+00 : f32
    %6 = vector.broadcast %cst_5 : f32 to vector<6x256xf32>
    %7 = arith.maximumf %5, %6 : vector<6x256xf32>
    %c0_6 = arith.constant 0 : index
    %c0_7 = arith.constant 0 : index
    %8 = vector.load %arg3[%c0_6, %c0_7] : memref<6x256xf32, #tpu.memory_space<vmem>>, vector<6x256xf32>
    tpu.vector_store %arg3[%c0_6, %c0_7], %7 {strides = array<i32>} : memref<6x256xf32, #tpu.memory_space<vmem>>, vector<6x256xf32>,
    return
  }
}

module attributes {stable_mosaic.version = 11 : i64} {
  func.func @_mm_kernel(%arg0: memref<6x150xf32, #tpu.memory_space<vmem>>, %arg1: memref<150x256xf32, #tpu.memory_space<vmem>>, %arg2: memref<6x1xf32, #tpu.memory_space<vmem>>, %arg3: memref<6x256xf32, #tpu.memory_space<vmem>>) attributes {dimension_semantics = [], scalar_prefetch = 0 : i64, scratch_operands = 0 : i64, tpu.core_type = #tpu.core_type<tc>} {
    %c0 = arith.constant 0 : index
    %c0_0 = arith.constant 0 : index
    %0 = vector.load %arg0[%c0, %c0_0] : memref<6x150xf32, #tpu.memory_space<vmem>>, vector<6x150xf32>
    %c0_1 = arith.constant 0 : index
    %c0_2 = arith.constant 0 : index
    %1 = vector.load %arg1[%c0_1, %c0_2] : memref<150x256xf32, #tpu.memory_space<vmem>>, vector<150x256xf32>
    %cst = arith.constant dense<0.000000e+00> : vector<6x256xf32>
    %2 = tpu.matmul %0, %1, %cst {dimension_numbers = #tpu.dot_dimension_numbers<[1], [0], [0], [1], [0, 0, 1, 1], [], []>} : vector<6x150xf32>, vector<150x256xf32>, vector<6x256xf32> -> vector<6x256xf32>
    %c0_3 = arith.constant 0 : index
    %c0_4 = arith.constant 0 : index
    %3 = vector.load %arg2[%c0_3, %c0_4] : memref<6x1xf32, #tpu.memory_space<vmem>>, vector<6x1xf32>
    %4 = vector.broadcast %3 : vector<6x1xf32> to vector<6x256xf32>
    %5 = arith.addf %2, %4 : vector<6x256xf32>
    %cst_5 = arith.constant 0.000000e+00 : f32
    %6 = vector.broadcast %cst_5 : f32 to vector<6x256xf32>
    %7 = arith.maximumf %5, %6 : vector<6x256xf32>
    %c0_6 = arith.constant 0 : index
    %c0_7 = arith.constant 0 : index
    %8 = vector.load %arg3[%c0_6, %c0_7] : memref<6x256xf32, #tpu.memory_space<vmem>>, vector<6x256xf32>
    tpu.vector_store %arg3[%c0_6, %c0_7], %7 {strides = array<i32>} : memref<6x256xf32, #tpu.memory_space<vmem>>, vector<6x256xf32>,
    return
  }
}

module attributes {stable_mosaic.version = 11 : i64} {
  func.func @_mm_kernel(%arg0: memref<6x24xf32, #tpu.memory_space<vmem>>, %arg1: memref<24x256xf32, #tpu.memory_space<vmem>>, %arg2: memref<6x1xf32, #tpu.memory_space<vmem>>, %arg3: memref<6x256xf32, #tpu.memory_space<vmem>>) attributes {dimension_semantics = [], scalar_prefetch = 0 : i64, scratch_operands = 0 : i64, tpu.core_type = #tpu.core_type<tc>} {
    %c0 = arith.constant 0 : index
    %c0_0 = arith.constant 0 : index
    %0 = vector.load %arg0[%c0, %c0_0] : memref<6x24xf32, #tpu.memory_space<vmem>>, vector<6x24xf32>
    %c0_1 = arith.constant 0 : index
    %c0_2 = arith.constant 0 : index
    %1 = vector.load %arg1[%c0_1, %c0_2] : memref<24x256xf32, #tpu.memory_space<vmem>>, vector<24x256xf32>
    %cst = arith.constant dense<0.000000e+00> : vector<6x256xf32>
    %2 = tpu.matmul %0, %1, %cst {dimension_numbers = #tpu.dot_dimension_numbers<[1], [0], [0], [1], [0, 0, 1, 1], [], []>} : vector<6x24xf32>, vector<24x256xf32>, vector<6x256xf32> -> vector<6x256xf32>
    %c0_3 = arith.constant 0 : index
    %c0_4 = arith.constant 0 : index
    %3 = vector.load %arg2[%c0_3, %c0_4] : memref<6x1xf32, #tpu.memory_space<vmem>>, vector<6x1xf32>
    %4 = vector.broadcast %3 : vector<6x1xf32> to vector<6x256xf32>
    %5 = arith.addf %2, %4 : vector<6x256xf32>
    %cst_5 = arith.constant 0.000000e+00 : f32
    %6 = vector.broadcast %cst_5 : f32 to vector<6x256xf32>
    %7 = arith.maximumf %5, %6 : vector<6x256xf32>
    %c0_6 = arith.constant 0 : index
    %c0_7 = arith.constant 0 : index
    %8 = vector.load %arg3[%c0_6, %c0_7] : memref<6x256xf32, #tpu.memory_space<vmem>>, vector<6x256xf32>
    tpu.vector_store %arg3[%c0_6, %c0_7], %7 {strides = array<i32>} : memref<6x256xf32, #tpu.memory_space<vmem>>, vector<6x256xf32>,
    return
  }
}

module attributes {stable_mosaic.version = 11 : i64} {
  func.func @_mm_kernel(%arg0: memref<6x54xf32, #tpu.memory_space<vmem>>, %arg1: memref<54x256xf32, #tpu.memory_space<vmem>>, %arg2: memref<6x1xf32, #tpu.memory_space<vmem>>, %arg3: memref<6x256xf32, #tpu.memory_space<vmem>>, %arg4: memref<6x256xf32, #tpu.memory_space<vmem>>) attributes {dimension_semantics = [], scalar_prefetch = 0 : i64, scratch_operands = 0 : i64, tpu.core_type = #tpu.core_type<tc>} {
    %c0 = arith.constant 0 : index
    %c0_0 = arith.constant 0 : index
    %0 = vector.load %arg0[%c0, %c0_0] : memref<6x54xf32, #tpu.memory_space<vmem>>, vector<6x54xf32>
    %c0_1 = arith.constant 0 : index
    %c0_2 = arith.constant 0 : index
    %1 = vector.load %arg1[%c0_1, %c0_2] : memref<54x256xf32, #tpu.memory_space<vmem>>, vector<54x256xf32>
    %cst = arith.constant dense<0.000000e+00> : vector<6x256xf32>
    %2 = tpu.matmul %0, %1, %cst {dimension_numbers = #tpu.dot_dimension_numbers<[1], [0], [0], [1], [0, 0, 1, 1], [], []>} : vector<6x54xf32>, vector<54x256xf32>, vector<6x256xf32> -> vector<6x256xf32>
    %c0_3 = arith.constant 0 : index
    %c0_4 = arith.constant 0 : index
    %3 = vector.load %arg2[%c0_3, %c0_4] : memref<6x1xf32, #tpu.memory_space<vmem>>, vector<6x1xf32>
    %4 = vector.broadcast %3 : vector<6x1xf32> to vector<6x256xf32>
    %5 = arith.addf %2, %4 : vector<6x256xf32>
    %c0_5 = arith.constant 0 : index
    %c0_6 = arith.constant 0 : index
    %6 = vector.load %arg3[%c0_5, %c0_6] : memref<6x256xf32, #tpu.memory_space<vmem>>, vector<6x256xf32>
    %7 = arith.addf %5, %6 : vector<6x256xf32>
    %cst_7 = arith.constant 0.000000e+00 : f32
    %8 = vector.broadcast %cst_7 : f32 to vector<6x256xf32>
    %9 = arith.maximumf %7, %8 : vector<6x256xf32>
    %c0_8 = arith.constant 0 : index
    %c0_9 = arith.constant 0 : index
    %10 = vector.load %arg4[%c0_8, %c0_9] : memref<6x256xf32, #tpu.memory_space<vmem>>, vector<6x256xf32>
    tpu.vector_store %arg4[%c0_8, %c0_9], %9 {strides = array<i32>} : memref<6x256xf32, #tpu.memory_space<vmem>>, vector<6x256xf32>,
    return
  }
}

module attributes {stable_mosaic.version = 11 : i64} {
  func.func @_mm_kernel(%arg0: memref<15x54xf32, #tpu.memory_space<vmem>>, %arg1: memref<54x64xf32, #tpu.memory_space<vmem>>, %arg2: memref<15x1xf32, #tpu.memory_space<vmem>>, %arg3: memref<15x64xf32, #tpu.memory_space<vmem>>) attributes {dimension_semantics = [], scalar_prefetch = 0 : i64, scratch_operands = 0 : i64, tpu.core_type = #tpu.core_type<tc>} {
    %c0 = arith.constant 0 : index
    %c0_0 = arith.constant 0 : index
    %0 = vector.load %arg0[%c0, %c0_0] : memref<15x54xf32, #tpu.memory_space<vmem>>, vector<15x54xf32>
    %c0_1 = arith.constant 0 : index
    %c0_2 = arith.constant 0 : index
    %1 = vector.load %arg1[%c0_1, %c0_2] : memref<54x64xf32, #tpu.memory_space<vmem>>, vector<54x64xf32>
    %cst = arith.constant dense<0.000000e+00> : vector<15x64xf32>
    %2 = tpu.matmul %0, %1, %cst {dimension_numbers = #tpu.dot_dimension_numbers<[1], [0], [0], [1], [0, 0, 1, 1], [], []>} : vector<15x54xf32>, vector<54x64xf32>, vector<15x64xf32> -> vector<15x64xf32>
    %c0_3 = arith.constant 0 : index
    %c0_4 = arith.constant 0 : index
    %3 = vector.load %arg2[%c0_3, %c0_4] : memref<15x1xf32, #tpu.memory_space<vmem>>, vector<15x1xf32>
    %4 = vector.broadcast %3 : vector<15x1xf32> to vector<15x64xf32>
    %5 = arith.addf %2, %4 : vector<15x64xf32>
    %cst_5 = arith.constant 0.000000e+00 : f32
    %6 = vector.broadcast %cst_5 : f32 to vector<15x64xf32>
    %7 = arith.maximumf %5, %6 : vector<15x64xf32>
    %c0_6 = arith.constant 0 : index
    %c0_7 = arith.constant 0 : index
    %8 = vector.load %arg3[%c0_6, %c0_7] : memref<15x64xf32, #tpu.memory_space<vmem>>, vector<15x64xf32>
    tpu.vector_store %arg3[%c0_6, %c0_7], %7 {strides = array<i32>} : memref<15x64xf32, #tpu.memory_space<vmem>>, vector<15x64xf32>,
    return
  }
}

module attributes {stable_mosaic.version = 11 : i64} {
  func.func @_mm_kernel(%arg0: memref<4x4xf32, #tpu.memory_space<vmem>>, %arg1: memref<4x240xf32, #tpu.memory_space<vmem>>, %arg2: memref<4x240xf32, #tpu.memory_space<vmem>>) attributes {dimension_semantics = [], scalar_prefetch = 0 : i64, scratch_operands = 0 : i64, tpu.core_type = #tpu.core_type<tc>} {
    %c0 = arith.constant 0 : index
    %c0_0 = arith.constant 0 : index
    %0 = vector.load %arg0[%c0, %c0_0] : memref<4x4xf32, #tpu.memory_space<vmem>>, vector<4x4xf32>
    %c0_1 = arith.constant 0 : index
    %c0_2 = arith.constant 0 : index
    %1 = vector.load %arg1[%c0_1, %c0_2] : memref<4x240xf32, #tpu.memory_space<vmem>>, vector<4x240xf32>
    %cst = arith.constant dense<0.000000e+00> : vector<4x240xf32>
    %2 = tpu.matmul %0, %1, %cst {dimension_numbers = #tpu.dot_dimension_numbers<[1], [0], [0], [1], [0, 0, 1, 1], [], []>} : vector<4x4xf32>, vector<4x240xf32>, vector<4x240xf32> -> vector<4x240xf32>
    %c0_3 = arith.constant 0 : index
    %c0_4 = arith.constant 0 : index
    %3 = vector.load %arg2[%c0_3, %c0_4] : memref<4x240xf32, #tpu.memory_space<vmem>>, vector<4x240xf32>
    tpu.vector_store %arg2[%c0_3, %c0_4], %2 {strides = array<i32>} : memref<4x240xf32, #tpu.memory_space<vmem>>, vector<4x240xf32>,
    return
  }
}

module attributes {stable_mosaic.version = 11 : i64} {
  func.func @_mm_kernel(%arg0: memref<6x135xf32, #tpu.memory_space<vmem>>, %arg1: memref<135x256xf32, #tpu.memory_space<vmem>>, %arg2: memref<6x1xf32, #tpu.memory_space<vmem>>, %arg3: memref<6x256xf32, #tpu.memory_space<vmem>>) attributes {dimension_semantics = [], scalar_prefetch = 0 : i64, scratch_operands = 0 : i64, tpu.core_type = #tpu.core_type<tc>} {
    %c0 = arith.constant 0 : index
    %c0_0 = arith.constant 0 : index
    %0 = vector.load %arg0[%c0, %c0_0] : memref<6x135xf32, #tpu.memory_space<vmem>>, vector<6x135xf32>
    %c0_1 = arith.constant 0 : index
    %c0_2 = arith.constant 0 : index
    %1 = vector.load %arg1[%c0_1, %c0_2] : memref<135x256xf32, #tpu.memory_space<vmem>>, vector<135x256xf32>
    %cst = arith.constant dense<0.000000e+00> : vector<6x256xf32>
    %2 = tpu.matmul %0, %1, %cst {dimension_numbers = #tpu.dot_dimension_numbers<[1], [0], [0], [1], [0, 0, 1, 1], [], []>} : vector<6x135xf32>, vector<135x256xf32>, vector<6x256xf32> -> vector<6x256xf32>
    %c0_3 = arith.constant 0 : index
    %c0_4 = arith.constant 0 : index
    %3 = vector.load %arg2[%c0_3, %c0_4] : memref<6x1xf32, #tpu.memory_space<vmem>>, vector<6x1xf32>
    %4 = vector.broadcast %3 : vector<6x1xf32> to vector<6x256xf32>
    %5 = arith.addf %2, %4 : vector<6x256xf32>
    %cst_5 = arith.constant 0.000000e+00 : f32
    %6 = vector.broadcast %cst_5 : f32 to vector<6x256xf32>
    %7 = arith.maximumf %5, %6 : vector<6x256xf32>
    %c0_6 = arith.constant 0 : index
    %c0_7 = arith.constant 0 : index
    %8 = vector.load %arg3[%c0_6, %c0_7] : memref<6x256xf32, #tpu.memory_space<vmem>>, vector<6x256xf32>
    tpu.vector_store %arg3[%c0_6, %c0_7], %7 {strides = array<i32>} : memref<6x256xf32, #tpu.memory_space<vmem>>, vector<6x256xf32>,
    return
  }
}

module attributes {stable_mosaic.version = 11 : i64} {
  func.func @_mm_kernel(%arg0: memref<6x54xf32, #tpu.memory_space<vmem>>, %arg1: memref<54x256xf32, #tpu.memory_space<vmem>>, %arg2: memref<6x1xf32, #tpu.memory_space<vmem>>, %arg3: memref<6x256xf32, #tpu.memory_space<vmem>>) attributes {dimension_semantics = [], scalar_prefetch = 0 : i64, scratch_operands = 0 : i64, tpu.core_type = #tpu.core_type<tc>} {
    %c0 = arith.constant 0 : index
    %c0_0 = arith.constant 0 : index
    %0 = vector.load %arg0[%c0, %c0_0] : memref<6x54xf32, #tpu.memory_space<vmem>>, vector<6x54xf32>
    %c0_1 = arith.constant 0 : index
    %c0_2 = arith.constant 0 : index
    %1 = vector.load %arg1[%c0_1, %c0_2] : memref<54x256xf32, #tpu.memory_space<vmem>>, vector<54x256xf32>
    %cst = arith.constant dense<0.000000e+00> : vector<6x256xf32>
    %2 = tpu.matmul %0, %1, %cst {dimension_numbers = #tpu.dot_dimension_numbers<[1], [0], [0], [1], [0, 0, 1, 1], [], []>} : vector<6x54xf32>, vector<54x256xf32>, vector<6x256xf32> -> vector<6x256xf32>
    %c0_3 = arith.constant 0 : index
    %c0_4 = arith.constant 0 : index
    %3 = vector.load %arg2[%c0_3, %c0_4] : memref<6x1xf32, #tpu.memory_space<vmem>>, vector<6x1xf32>
    %4 = vector.broadcast %3 : vector<6x1xf32> to vector<6x256xf32>
    %5 = arith.addf %2, %4 : vector<6x256xf32>
    %cst_5 = arith.constant 0.000000e+00 : f32
    %6 = vector.broadcast %cst_5 : f32 to vector<6x256xf32>
    %7 = arith.maximumf %5, %6 : vector<6x256xf32>
    %c0_6 = arith.constant 0 : index
    %c0_7 = arith.constant 0 : index
    %8 = vector.load %arg3[%c0_6, %c0_7] : memref<6x256xf32, #tpu.memory_space<vmem>>, vector<6x256xf32>
    tpu.vector_store %arg3[%c0_6, %c0_7], %7 {strides = array<i32>} : memref<6x256xf32, #tpu.memory_space<vmem>>, vector<6x256xf32>,
    return
  }
}

module attributes {stable_mosaic.version = 11 : i64} {
  func.func @_mm_kernel(%arg0: memref<6x24xf32, #tpu.memory_space<vmem>>, %arg1: memref<24x256xf32, #tpu.memory_space<vmem>>, %arg2: memref<6x1xf32, #tpu.memory_space<vmem>>, %arg3: memref<6x256xf32, #tpu.memory_space<vmem>>, %arg4: memref<6x256xf32, #tpu.memory_space<vmem>>) attributes {dimension_semantics = [], scalar_prefetch = 0 : i64, scratch_operands = 0 : i64, tpu.core_type = #tpu.core_type<tc>} {
    %c0 = arith.constant 0 : index
    %c0_0 = arith.constant 0 : index
    %0 = vector.load %arg0[%c0, %c0_0] : memref<6x24xf32, #tpu.memory_space<vmem>>, vector<6x24xf32>
    %c0_1 = arith.constant 0 : index
    %c0_2 = arith.constant 0 : index
    %1 = vector.load %arg1[%c0_1, %c0_2] : memref<24x256xf32, #tpu.memory_space<vmem>>, vector<24x256xf32>
    %cst = arith.constant dense<0.000000e+00> : vector<6x256xf32>
    %2 = tpu.matmul %0, %1, %cst {dimension_numbers = #tpu.dot_dimension_numbers<[1], [0], [0], [1], [0, 0, 1, 1], [], []>} : vector<6x24xf32>, vector<24x256xf32>, vector<6x256xf32> -> vector<6x256xf32>
    %c0_3 = arith.constant 0 : index
    %c0_4 = arith.constant 0 : index
    %3 = vector.load %arg2[%c0_3, %c0_4] : memref<6x1xf32, #tpu.memory_space<vmem>>, vector<6x1xf32>
    %4 = vector.broadcast %3 : vector<6x1xf32> to vector<6x256xf32>
    %5 = arith.addf %2, %4 : vector<6x256xf32>
    %c0_5 = arith.constant 0 : index
    %c0_6 = arith.constant 0 : index
    %6 = vector.load %arg3[%c0_5, %c0_6] : memref<6x256xf32, #tpu.memory_space<vmem>>, vector<6x256xf32>
    %7 = arith.addf %5, %6 : vector<6x256xf32>
    %cst_7 = arith.constant 0.000000e+00 : f32
    %8 = vector.broadcast %cst_7 : f32 to vector<6x256xf32>
    %9 = arith.maximumf %7, %8 : vector<6x256xf32>
    %c0_8 = arith.constant 0 : index
    %c0_9 = arith.constant 0 : index
    %10 = vector.load %arg4[%c0_8, %c0_9] : memref<6x256xf32, #tpu.memory_space<vmem>>, vector<6x256xf32>
    tpu.vector_store %arg4[%c0_8, %c0_9], %9 {strides = array<i32>} : memref<6x256xf32, #tpu.memory_space<vmem>>, vector<6x256xf32>,
    return
  }
}

module attributes {stable_mosaic.version = 11 : i64} {
  func.func @_mm_kernel(%arg0: memref<1x54xf32, #tpu.memory_space<vmem>>, %arg1: memref<54x1024xf32, #tpu.memory_space<vmem>>, %arg2: memref<1x1xf32, #tpu.memory_space<vmem>>, %arg3: memref<1x1024xf32, #tpu.memory_space<vmem>>) attributes {dimension_semantics = [], scalar_prefetch = 0 : i64, scratch_operands = 0 : i64, tpu.core_type = #tpu.core_type<tc>} {
    %c0 = arith.constant 0 : index
    %c0_0 = arith.constant 0 : index
    %0 = vector.load %arg0[%c0, %c0_0] : memref<1x54xf32, #tpu.memory_space<vmem>>, vector<1x54xf32>
    %c0_1 = arith.constant 0 : index
    %c0_2 = arith.constant 0 : index
    %1 = vector.load %arg1[%c0_1, %c0_2] : memref<54x1024xf32, #tpu.memory_space<vmem>>, vector<54x1024xf32>
    %cst = arith.constant dense<0.000000e+00> : vector<1x1024xf32>
    %2 = tpu.matmul %0, %1, %cst {dimension_numbers = #tpu.dot_dimension_numbers<[1], [0], [0], [1], [0, 0, 1, 1], [], []>} : vector<1x54xf32>, vector<54x1024xf32>, vector<1x1024xf32> -> vector<1x1024xf32>
    %c0_3 = arith.constant 0 : index
    %c0_4 = arith.constant 0 : index
    %3 = vector.load %arg2[%c0_3, %c0_4] : memref<1x1xf32, #tpu.memory_space<vmem>>, vector<1x1xf32>
    %4 = vector.broadcast %3 : vector<1x1xf32> to vector<1x1024xf32>
    %5 = arith.addf %2, %4 : vector<1x1024xf32>
    %cst_5 = arith.constant 0.000000e+00 : f32
    %6 = vector.broadcast %cst_5 : f32 to vector<1x1024xf32>
    %7 = arith.maximumf %5, %6 : vector<1x1024xf32>
    %c0_6 = arith.constant 0 : index
    %c0_7 = arith.constant 0 : index
    %8 = vector.load %arg3[%c0_6, %c0_7] : memref<1x1024xf32, #tpu.memory_space<vmem>>, vector<1x1024xf32>
    tpu.vector_store %arg3[%c0_6, %c0_7], %7 {strides = array<i32>} : memref<1x1024xf32, #tpu.memory_space<vmem>>, vector<1x1024xf32>,
    return
  }
}

</mosaic_0001>

<llo_original>
// kernel: riabnet_forward.11
$region0: #{riabnet_forward.11}
  #allocation0 [shape = 'u32[]', space=smem, size = 0x4, offset = 0x4, fixed_abs, tag = 'smem constant byte address 0x4 - core index']
  #allocation1 [shape = 'u32[144,128]{1,0:T(1,128)}', space=vmem, size = 0x12000, scoped, tag = 'internal scratch']
  %s0 = inlined_call_operand.vmem [shape: f32[6,9], index: 0, kind: input, shape index: {}]
  %s1 = inlined_call_operand.vmem [shape: f32[9,256], index: 1, kind: input, shape index: {}]
  %s2 = inlined_call_operand.vmem [shape: f32[6,1], index: 2, kind: input, shape index: {}]
  %s3 = inlined_call_operand.vmem [shape: f32[6,256], index: 3, kind: output, shape index: {}]
  %s4 = sld [smem:[#allocation0]]
  $region22: #{riabnet_forward.11} parent=0
    _
  %s6 = ssub.s32 1, %s4
  %s7 = scalar_select 0, %s6, %s4
  // Predicated region
  $region2: #{riabnet_forward.11} parent=0 // pred_check
    _
  $region3: #{riabnet_forward.11} parent=0 // pred_check_branch
    %9 = sbr.rel (0) target = $region5
  $region4: #{riabnet_forward.11} parent=0 // pred_region
    _
  $region5: #{riabnet_forward.11} parent=0 // pred_fallthru
    _
  // Predicated region
  $region6: #{riabnet_forward.11} parent=0 // pred_check
    _
  $region7: #{riabnet_forward.11} parent=0 // pred_check_branch
    %11 = sbr.rel (0) target = $region9
  $region8: #{riabnet_forward.11} parent=0 // pred_region
    _
  $region9: #{riabnet_forward.11} parent=0 // pred_fallthru
    _
  // Predicated region
  $region10: #{riabnet_forward.11} parent=0 // pred_check
    _
  $region11: #{riabnet_forward.11} parent=0 // pred_check_branch
    %13 = sbr.rel (0) target = $region13
  $region12: #{riabnet_forward.11} parent=0 // pred_region
    _
  $region13: #{riabnet_forward.11} parent=0 // pred_fallthru
    _
  %v14 = vld [vmem:[%s0] sm:$0x3f]
  %v15 = vld [vmem:[%s1] sm:$0xff]
  %v16 = vld [vmem:[%s1 + $0x8] sm:$0xff]
  %v17 = vld [vmem:[%s1 + $0x10] sm:$0x1]
  %v18 = vld [vmem:[%s1 + $0x18] sm:$0x1]
  %v19 = vld [vmem:[%s2] sm:$0x3f]
  %21 = vset.pattern.permute.xlu0 0
  %22 = vperm.xlu0 %21, %v19
  %v23 = vpop.permute.xlu0 %22
  %vm25 = vcmask 72704
  %v27 = vsel %vm25, %v14, 0
  %vm29 = vcmask 1040384
  %v31 = vsel %vm29, %v17, 0
  %v34 = vsel %vm29, %v18, 0
  %36 = vmatprep.subr.mxu0 0.0
  %37 = vmatpush1.msra.mxu0 0.0
  %38 = vmatprep.subr.mxu0 0.0
  %39 = vmatpush1.msra.mxu0 0.0
  %40 = vmatprep.subr.mxu0 0.0
  %41 = vmatpush1.msra.mxu0 0.0
  %42 = vmatprep.subr.mxu0 0.0
  %43 = vmatpush1.msra.mxu0 0.0
  %44 = vmatprep.subr.mxu0 0.0
  %45 = vmatpush1.msra.mxu0 0.0
  %46 = vmatprep.subr.mxu0 0.0
  %47 = vmatpush1.msra.mxu0 0.0
  %48 = vmatprep.subr.mxu0 0.0
  %49 = vmatpush1.msra.mxu0 0.0
  %50 = vmatprep.subr.mxu0 0.0
  %51 = vmatpush1.msra.mxu0 0.0
  %52 = vmatprep.subr.mxu0 0.0
  %53 = vmatpush1.msra.mxu0 0.0
  %54 = vmatprep.subr.mxu0 0.0
  %55 = vmatpush1.msra.mxu0 0.0
  %56 = vmatprep.subr.mxu0 0.0
  %57 = vmatpush1.msra.mxu0 0.0
  %58 = vmatprep.subr.mxu0 0.0
  %59 = vmatpush1.msra.mxu0 0.0
  %60 = vmatprep.subr.mxu0 0.0
  %61 = vmatpush1.msra.mxu0 0.0
  %62 = vmatprep.subr.mxu0 0.0
  %63 = vmatpush1.msra.mxu0 0.0
  %64 = vmatprep.subr.mxu0 %v34
  %65 = vmatpush1.msra.mxu0 %v31
  %66 = vmatprep.subr.mxu0 %v16
  %67 = vmatpush1.msra.mxu0 %v15
  %68 = vmatprep.subr.mxu0 0.0
  %69 = vmatpush2.msra.mxu0 0.0
  %70 = vmatprep.subr.mxu0 0.0
  %71 = vmatpush2.msra.mxu0 0.0
  %72 = vmatprep.subr.mxu0 0.0
  %73 = vmatpush2.msra.mxu0 0.0
  %74 = vmatprep.subr.mxu0 0.0
  %75 = vmatpush2.msra.mxu0 0.0
  %76 = vmatprep.subr.mxu0 0.0
  %77 = vmatpush2.msra.mxu0 0.0
  %78 = vmatprep.subr.mxu0 0.0
  %79 = vmatpush2.msra.mxu0 0.0
  %80 = vmatprep.subr.mxu0 0.0
  %81 = vmatpush2.msra.mxu0 0.0
  %82 = vmatprep.subr.mxu0 0.0
  %83 = vmatpush2.msra.mxu0 0.0
  %84 = vmatprep.subr.mxu0 0.0
  %85 = vmatpush2.msra.mxu0 0.0
  %86 = vmatprep.subr.mxu0 0.0
  %87 = vmatpush2.msra.mxu0 0.0
  %88 = vmatprep.subr.mxu0 0.0
  %89 = vmatpush2.msra.mxu0 0.0
  %90 = vmatprep.subr.mxu0 0.0
  %91 = vmatpush2.msra.mxu0 0.0
  %92 = vmatprep.subr.mxu0 0.0
  %93 = vmatpush2.msra.mxu0 0.0
  %94 = vmatprep.subr.mxu0 0.0
  %95 = vmatpush2.msra.mxu0 0.0
  %96 = vmatprep.subr.mxu0 0.0
  %97 = vmatpush2.msra.mxu0 0.0
  %98 = vmatprep.subr.mxu0 0.0
  %99 = vmatpush2.msra.mxu0 0.0
  %100 = vmatprep.mubr.f32.mxu0 0.0
  %101 = vmatmul.mubr.f32.gmra.mxu0 %v27
  %v102 = vpop.f32.mrf.mxu0
  %v103 = vadd.f32 %v23, %v102
  %v104 = vpop.f32.mrf.mxu0
  %v105 = vadd.f32 %v23, %v104
  %106 = vdwg.mxu0
  %v107 = vmax.f32 %v103, 0.0
  %v108 = vmax.f32 %v105, 0.0
  %109 = vst [vmem:[%s3] sm:$0x3f] %v107
  %110 = vst [vmem:[%s3 + $0x8] sm:$0x3f] %v108
  // Predicated region
  $region14: #{riabnet_forward.11} parent=0 // pred_check
    _
  $region15: #{riabnet_forward.11} parent=0 // pred_check_branch
    %112 = sbr.rel (0) target = $region17
  $region16: #{riabnet_forward.11} parent=0 // pred_region
    _
  $region17: #{riabnet_forward.11} parent=0 // pred_fallthru
    _
  // Predicated region
  $region18: #{riabnet_forward.11} parent=0 // pred_check
    _
  $region19: #{riabnet_forward.11} parent=0 // pred_check_branch
    %114 = sbr.rel (0) target = $region21
  $region20: #{riabnet_forward.11} parent=0 // pred_region
    _
  $region21: #{riabnet_forward.11} parent=0 // pred_fallthru
    _

// kernel: mul.32
$region0: #{mul.32}
  #allocation0 [shape = 's32[1]{0}', space=sflag, size = 0x4, scoped, tag = 'scoped memory for mul.32']
  %s0 = inlined_call_operand.vmem [shape: f32[6,4], index: 0, kind: input, shape index: {}]
  %s1 = inlined_call_operand.vmem [shape: f32[6,4,8,8], index: 1, kind: output, shape index: {}]
  // Predicated region
  $region2: #{mul.32} parent=0 // pred_check
    _
  $region3: #{mul.32} parent=0 // pred_check_branch
    %3 = sbr.rel (0) target = $region5
  $region4: #{mul.32} parent=0 // pred_region
    _
  $region5: #{mul.32} parent=0 // pred_fallthru
    _
  %v4 = vld [vmem:[%s0] ss:$0 sm:$0xff]
  %5 = vbcast.lane.b32.xlu0 %v4, 0
  %v6 = vpop.permute.xlu0 %5
  %7 = vst [vmem:[%s1] sm:$0xff] %v6
  %s8 = scalar_lea.vmem %s0, 1
  %v9 = vld [vmem:[%s8] ss:$0 sm:$0xff]
  %10 = vbcast.lane.b32.xlu0 %v9, 0
  %v11 = vpop.permute.xlu0 %10
  %s12 = scalar_lea.vmem %s1, 32
  %13 = vst [vmem:[%s12] sm:$0xff] %v11
  %s14 = scalar_lea.vmem %s0, 2
  %v15 = vld [vmem:[%s14] ss:$0 sm:$0xff]
  %16 = vbcast.lane.b32.xlu0 %v15, 0
  %v17 = vpop.permute.xlu0 %16
  %s18 = scalar_lea.vmem %s1, 64
  %19 = vst [vmem:[%s18] sm:$0xff] %v17
  %s20 = scalar_lea.vmem %s0, 3
  %v21 = vld [vmem:[%s20] ss:$0 sm:$0xff]
  %22 = vbcast.lane.b32.xlu0 %v21, 0
  %v23 = vpop.permute.xlu0 %22
  %s24 = scalar_lea.vmem %s1, 96
  %25 = vst [vmem:[%s24] sm:$0xff] %v23
  %s26 = scalar_lea.vmem %s0, 4
  %v27 = vld [vmem:[%s26] ss:$0 sm:$0xff]
  %28 = vbcast.lane.b32.xlu0 %v27, 0
  %v29 = vpop.permute.xlu0 %28
  %s30 = scalar_lea.vmem %s1, 128
  %31 = vst [vmem:[%s30] sm:$0xff] %v29
  %s32 = scalar_lea.vmem %s0, 5
  %v33 = vld [vmem:[%s32] ss:$0 sm:$0xff]
  %34 = vbcast.lane.b32.xlu0 %v33, 0
  %v35 = vpop.permute.xlu0 %34
  %s36 = scalar_lea.vmem %s1, 160
  %37 = vst [vmem:[%s36] sm:$0xff] %v35
  %v38 = vld [vmem:[%s0] ss:$0 sm:$0xff]
  %39 = vbcast.lane.b32.xlu0 %v38, 1
  %v40 = vpop.permute.xlu0 %39
  %s41 = scalar_lea.vmem %s1, 8
  %42 = vst [vmem:[%s41] sm:$0xff] %v40
  %s43 = scalar_lea.vmem %s0, 1
  %v44 = vld [vmem:[%s43] ss:$0 sm:$0xff]
  %45 = vbcast.lane.b32.xlu0 %v44, 1
  %v46 = vpop.permute.xlu0 %45
  %s47 = scalar_lea.vmem %s1, 40
  %48 = vst [vmem:[%s47] sm:$0xff] %v46
  %s49 = scalar_lea.vmem %s0, 2
  %v50 = vld [vmem:[%s49] ss:$0 sm:$0xff]
  %51 = vbcast.lane.b32.xlu0 %v50, 1
  %v52 = vpop.permute.xlu0 %51
  %s53 = scalar_lea.vmem %s1, 72
  %54 = vst [vmem:[%s53] sm:$0xff] %v52
  %s55 = scalar_lea.vmem %s0, 3
  %v56 = vld [vmem:[%s55] ss:$0 sm:$0xff]
  %57 = vbcast.lane.b32.xlu0 %v56, 1
  %v58 = vpop.permute.xlu0 %57
  %s59 = scalar_lea.vmem %s1, 104
  %60 = vst [vmem:[%s59] sm:$0xff] %v58
  %s61 = scalar_lea.vmem %s0, 4
  %v62 = vld [vmem:[%s61] ss:$0 sm:$0xff]
  %63 = vbcast.lane.b32.xlu0 %v62, 1
  %v64 = vpop.permute.xlu0 %63
  %s65 = scalar_lea.vmem %s1, 136
  %66 = vst [vmem:[%s65] sm:$0xff] %v64
  %s67 = scalar_lea.vmem %s0, 5
  %v68 = vld [vmem:[%s67] ss:$0 sm:$0xff]
  %69 = vbcast.lane.b32.xlu0 %v68, 1
  %v70 = vpop.permute.xlu0 %69
  %s71 = scalar_lea.vmem %s1, 168
  %72 = vst [vmem:[%s71] sm:$0xff] %v70
  %v73 = vld [vmem:[%s0] ss:$0 sm:$0xff]
  %74 = vbcast.lane.b32.xlu0 %v73, 2
  %v75 = vpop.permute.xlu0 %74
  %s76 = scalar_lea.vmem %s1, 16
  %77 = vst [vmem:[%s76] sm:$0xff] %v75
  %s78 = scalar_lea.vmem %s0, 1
  %v79 = vld [vmem:[%s78] ss:$0 sm:$0xff]
  %80 = vbcast.lane.b32.xlu0 %v79, 2
  %v81 = vpop.permute.xlu0 %80
  %s82 = scalar_lea.vmem %s1, 48
  %83 = vst [vmem:[%s82] sm:$0xff] %v81
  %s84 = scalar_lea.vmem %s0, 2
  %v85 = vld [vmem:[%s84] ss:$0 sm:$0xff]
  %86 = vbcast.lane.b32.xlu0 %v85, 2
  %v87 = vpop.permute.xlu0 %86
  %s88 = scalar_lea.vmem %s1, 80
  %89 = vst [vmem:[%s88] sm:$0xff] %v87
  %s90 = scalar_lea.vmem %s0, 3
  %v91 = vld [vmem:[%s90] ss:$0 sm:$0xff]
  %92 = vbcast.lane.b32.xlu0 %v91, 2
  %v93 = vpop.permute.xlu0 %92
  %s94 = scalar_lea.vmem %s1, 112
  %95 = vst [vmem:[%s94] sm:$0xff] %v93
  %s96 = scalar_lea.vmem %s0, 4
  %v97 = vld [vmem:[%s96] ss:$0 sm:$0xff]
  %98 = vbcast.lane.b32.xlu0 %v97, 2
  %v99 = vpop.permute.xlu0 %98
  %s100 = scalar_lea.vmem %s1, 144
  %101 = vst [vmem:[%s100] sm:$0xff] %v99
  %s102 = scalar_lea.vmem %s0, 5
  %v103 = vld [vmem:[%s102] ss:$0 sm:$0xff]
  %104 = vbcast.lane.b32.xlu0 %v103, 2
  %v105 = vpop.permute.xlu0 %104
  %s106 = scalar_lea.vmem %s1, 176
  %107 = vst [vmem:[%s106] sm:$0xff] %v105
  %v108 = vld [vmem:[%s0] ss:$0 sm:$0xff]
  %109 = vbcast.lane.b32.xlu0 %v108, 3
  %v110 = vpop.permute.xlu0 %109
  %s111 = scalar_lea.vmem %s1, 24
  %112 = vst [vmem:[%s111] sm:$0xff] %v110
  %s113 = scalar_lea.vmem %s0, 1
  %v114 = vld [vmem:[%s113] ss:$0 sm:$0xff]
  %115 = vbcast.lane.b32.xlu0 %v114, 3
  %v116 = vpop.permute.xlu0 %115
  %s117 = scalar_lea.vmem %s1, 56
  %118 = vst [vmem:[%s117] sm:$0xff] %v116
  %s119 = scalar_lea.vmem %s0, 2
  %v120 = vld [vmem:[%s119] ss:$0 sm:$0xff]
  %121 = vbcast.lane.b32.xlu0 %v120, 3
  %v122 = vpop.permute.xlu0 %121
  %s123 = scalar_lea.vmem %s1, 88
  %124 = vst [vmem:[%s123] sm:$0xff] %v122
  %s125 = scalar_lea.vmem %s0, 3
  %v126 = vld [vmem:[%s125] ss:$0 sm:$0xff]
  %127 = vbcast.lane.b32.xlu0 %v126, 3
  %v128 = vpop.permute.xlu0 %127
  %s129 = scalar_lea.vmem %s1, 120
  %130 = vst [vmem:[%s129] sm:$0xff] %v128
  %s131 = scalar_lea.vmem %s0, 4
  %v132 = vld [vmem:[%s131] ss:$0 sm:$0xff]
  %133 = vbcast.lane.b32.xlu0 %v132, 3
  %v134 = vpop.permute.xlu0 %133
  %s135 = scalar_lea.vmem %s1, 152
  %136 = vst [vmem:[%s135] sm:$0xff] %v134
  %s137 = scalar_lea.vmem %s0, 5
  %v138 = vld [vmem:[%s137] ss:$0 sm:$0xff]
  %139 = vbcast.lane.b32.xlu0 %v138, 3
  %v140 = vpop.permute.xlu0 %139
  %s141 = scalar_lea.vmem %s1, 184
  %142 = vst [vmem:[%s141] sm:$0xff] %v140

// kernel: mul.1
$region0: #{mul.1}
  #allocation0 [shape = 's32[1]{0}', space=sflag, size = 0x4, scoped, tag = 'scoped memory for mul.1']
  %s0 = inlined_call_operand.vmem [shape: f32[6,256], index: 0, kind: input, shape index: {}]
  %s1 = inlined_call_operand.vmem [shape: f32[6,256], index: 1, kind: input, shape index: {}]
  %s2 = inlined_call_operand.vmem [shape: f32[6,256], index: 2, kind: output, shape index: {}]
  %v3 = vld [vmem:[%s0] sm:$0x3f]
  %v4 = vld [vmem:[%s1] sm:$0x3f]
  %5 = xla_tuple %v3, %v4
  %6 = xla_tuple %5
  %v7 = vmul.f32 %v3, %v4
  %8 = xla_tuple %v7
  %9 = vst [vmem:[%s2] sm:$0xff] %v7
  %s10 = scalar_lea.vmem %s0, 8
  %v11 = vld [vmem:[%s10] sm:$0x3f]
  %s12 = scalar_lea.vmem %s1, 8
  %v13 = vld [vmem:[%s12] sm:$0x3f]
  %14 = xla_tuple %v11, %v13
  %15 = xla_tuple %14
  %v16 = vmul.f32 %v11, %v13
  %17 = xla_tuple %v16
  %s18 = scalar_lea.vmem %s2, 8
  %19 = vst [vmem:[%s18] sm:$0xff] %v16

// kernel: riabnet_forward.12
$region0: #{riabnet_forward.12}
  #allocation0 [shape = 'u32[]', space=smem, size = 0x4, offset = 0x4, fixed_abs, tag = 'smem constant byte address 0x4 - core index']
  #allocation1 [shape = 'u32[144,128]{1,0:T(1,128)}', space=vmem, size = 0x12000, scoped, tag = 'internal scratch']
  %s0 = inlined_call_operand.vmem [shape: f32[6,150], index: 0, kind: input, shape index: {}]
  %s1 = inlined_call_operand.vmem [shape: f32[150,256], index: 1, kind: input, shape index: {}]
  %s2 = inlined_call_operand.vmem [shape: f32[6,1], index: 2, kind: input, shape index: {}]
  %s3 = inlined_call_operand.vmem [shape: f32[6,256], index: 3, kind: output, shape index: {}]
  %s4 = sld [smem:[#allocation0]]
  $region22: #{riabnet_forward.12} parent=0
    _
  %s6 = ssub.s32 1, %s4
  %s7 = scalar_select 0, %s6, %s4
  // Predicated region
  $region2: #{riabnet_forward.12} parent=0 // pred_check
    _
  $region3: #{riabnet_forward.12} parent=0 // pred_check_branch
    %9 = sbr.rel (0) target = $region5
  $region4: #{riabnet_forward.12} parent=0 // pred_region
    _
  $region5: #{riabnet_forward.12} parent=0 // pred_fallthru
    _
  // Predicated region
  $region6: #{riabnet_forward.12} parent=0 // pred_check
    _
  $region7: #{riabnet_forward.12} parent=0 // pred_check_branch
    %11 = sbr.rel (0) target = $region9
  $region8: #{riabnet_forward.12} parent=0 // pred_region
    _
  $region9: #{riabnet_forward.12} parent=0 // pred_fallthru
    _
  // Predicated region
  $region10: #{riabnet_forward.12} parent=0 // pred_check
    _
  $region11: #{riabnet_forward.12} parent=0 // pred_check_branch
    %13 = sbr.rel (0) target = $region13
  $region12: #{riabnet_forward.12} parent=0 // pred_region
    _
  $region13: #{riabnet_forward.12} parent=0 // pred_fallthru
    _
  %v14 = vld [vmem:[%s0] sm:$0x3f]
  %v15 = vld [vmem:[%s0 + $0x8] sm:$0x3f]
  %v16 = vld [vmem:[%s1] sm:$0xff]
  %v17 = vld [vmem:[%s1 + $0x8] sm:$0xff]
  %v18 = vld [vmem:[%s1 + $0x10] sm:$0xff]
  %v19 = vld [vmem:[%s1 + $0x18] sm:$0xff]
  %v20 = vld [vmem:[%s1 + $0x20] sm:$0xff]
  %v21 = vld [vmem:[%s1 + $0x28] sm:$0xff]
  %v22 = vld [vmem:[%s1 + $0x30] sm:$0xff]
  %v23 = vld [vmem:[%s1 + $0x38] sm:$0xff]
  %v24 = vld [vmem:[%s1 + $0x40] sm:$0xff]
  %v25 = vld [vmem:[%s1 + $0x48] sm:$0xff]
  %v26 = vld [vmem:[%s1 + $0x50] sm:$0xff]
  %v27 = vld [vmem:[%s1 + $0x58] sm:$0xff]
  %v28 = vld [vmem:[%s1 + $0x60] sm:$0xff]
  %v29 = vld [vmem:[%s1 + $0x68] sm:$0xff]
  %v30 = vld [vmem:[%s1 + $0x70] sm:$0xff]
  %v31 = vld [vmem:[%s1 + $0x78] sm:$0xff]
  %v32 = vld [vmem:[%s1 + $0x80] sm:$0xff]
  %v33 = vld [vmem:[%s1 + $0x88] sm:$0xff]
  %v34 = vld [vmem:[%s1 + $0x90] sm:$0xff]
  %v35 = vld [vmem:[%s1 + $0x98] sm:$0xff]
  %v36 = vld [vmem:[%s1 + $0xa0] sm:$0xff]
  %v37 = vld [vmem:[%s1 + $0xa8] sm:$0xff]
  %v38 = vld [vmem:[%s1 + $0xb0] sm:$0xff]
  %v39 = vld [vmem:[%s1 + $0xb8] sm:$0xff]
  %v40 = vld [vmem:[%s1 + $0xc0] sm:$0xff]
  %v41 = vld [vmem:[%s1 + $0xc8] sm:$0xff]
  %v42 = vld [vmem:[%s1 + $0xd0] sm:$0xff]
  %v43 = vld [vmem:[%s1 + $0xd8] sm:$0xff]
  %v44 = vld [vmem:[%s1 + $0xe0] sm:$0xff]
  %v45 = vld [vmem:[%s1 + $0xe8] sm:$0xff]
  %v46 = vld [vmem:[%s1 + $0xf0] sm:$0xff]
  %v47 = vld [vmem:[%s1 + $0xf8] sm:$0xff]
  %v48 = vld [vmem:[%s1 + $0x100] sm:$0xff]
  %v49 = vld [vmem:[%s1 + $0x108] sm:$0xff]
  %v50 = vld [vmem:[%s1 + $0x110] sm:$0xff]
  %v51 = vld [vmem:[%s1 + $0x118] sm:$0xff]
  %v52 = vld [vmem:[%s1 + $0x120] sm:$0x3f]
  %v53 = vld [vmem:[%s1 + $0x128] sm:$0x3f]
  %v54 = vld [vmem:[%s2] sm:$0x3f]
  %56 = vset.pattern.permute.xlu0 0
  %57 = vperm.xlu0 %56, %v54
  %v58 = vpop.permute.xlu0 %57
  %vm60 = vcmask 179200
  %v62 = vsel %vm60, %v15, 0
  %vm64 = vcmask 1045504
  %v66 = vsel %vm64, %v52, 0
  %v69 = vsel %vm64, %v53, 0
  %71 = vmatprep.subr.mxu0 %v47
  %72 = vmatpush1.msra.mxu0 %v46
  %73 = vmatprep.subr.mxu0 %v45
  %74 = vmatpush1.msra.mxu0 %v44
  %75 = vmatprep.subr.mxu0 %v43
  %76 = vmatpush1.msra.mxu0 %v42
  %77 = vmatprep.subr.mxu0 %v41
  %78 = vmatpush1.msra.mxu0 %v40
  %79 = vmatprep.subr.mxu0 %v39
  %80 = vmatpush1.msra.mxu0 %v38
  %81 = vmatprep.subr.mxu0 %v37
  %82 = vmatpush1.msra.mxu0 %v36
  %83 = vmatprep.subr.mxu0 %v35
  %84 = vmatpush1.msra.mxu0 %v34
  %85 = vmatprep.subr.mxu0 %v33
  %86 = vmatpush1.msra.mxu0 %v32
  %87 = vmatprep.subr.mxu0 %v31
  %88 = vmatpush1.msra.mxu0 %v30
  %89 = vmatprep.subr.mxu0 %v29
  %90 = vmatpush1.msra.mxu0 %v28
  %91 = vmatprep.subr.mxu0 %v27
  %92 = vmatpush1.msra.mxu0 %v26
  %93 = vmatprep.subr.mxu0 %v25
  %94 = vmatpush1.msra.mxu0 %v24
  %95 = vmatprep.subr.mxu0 %v23
  %96 = vmatpush1.msra.mxu0 %v22
  %97 = vmatprep.subr.mxu0 %v21
  %98 = vmatpush1.msra.mxu0 %v20
  %99 = vmatprep.subr.mxu0 %v19
  %100 = vmatpush1.msra.mxu0 %v18
  %101 = vmatprep.subr.mxu0 %v17
  %102 = vmatpush1.msra.mxu0 %v16
  %103 = vmatprep.subr.mxu0 0.0
  %104 = vmatpush2.msra.mxu0 0.0
  %105 = vmatprep.subr.mxu0 0.0
  %106 = vmatpush2.msra.mxu0 0.0
  %107 = vmatprep.subr.mxu0 0.0
  %108 = vmatpush2.msra.mxu0 0.0
  %109 = vmatprep.subr.mxu0 0.0
  %110 = vmatpush2.msra.mxu0 0.0
  %111 = vmatprep.subr.mxu0 0.0
  %112 = vmatpush2.msra.mxu0 0.0
  %113 = vmatprep.subr.mxu0 0.0
  %114 = vmatpush2.msra.mxu0 0.0
  %115 = vmatprep.subr.mxu0 0.0
  %116 = vmatpush2.msra.mxu0 0.0
  %117 = vmatprep.subr.mxu0 0.0
  %118 = vmatpush2.msra.mxu0 0.0
  %119 = vmatprep.subr.mxu0 0.0
  %120 = vmatpush2.msra.mxu0 0.0
  %121 = vmatprep.subr.mxu0 0.0
  %122 = vmatpush2.msra.mxu0 0.0
  %123 = vmatprep.subr.mxu0 0.0
  %124 = vmatpush2.msra.mxu0 0.0
  %125 = vmatprep.subr.mxu0 0.0
  %126 = vmatpush2.msra.mxu0 0.0
  %127 = vmatprep.subr.mxu0 0.0
  %128 = vmatpush2.msra.mxu0 0.0
  %129 = vmatprep.subr.mxu0 %v69
  %130 = vmatpush2.msra.mxu0 %v66
  %131 = vmatprep.subr.mxu0 %v51
  %132 = vmatpush2.msra.mxu0 %v50
  %133 = vmatprep.subr.mxu0 %v49
  %134 = vmatpush2.msra.mxu0 %v48
  %135 = vmatprep.mubr.f32.mxu0 %v62
  %136 = vmatmul.mubr.f32.gmra.mxu0 %v14
  %v137 = vpop.f32.mrf.mxu0
  %v138 = vadd.f32 %v58, %v137
  %v139 = vpop.f32.mrf.mxu0
  %v140 = vadd.f32 %v58, %v139
  %141 = vdwg.mxu0
  %v142 = vmax.f32 %v138, 0.0
  %v143 = vmax.f32 %v140, 0.0
  %144 = vst [vmem:[%s3] sm:$0x3f] %v142
  %145 = vst [vmem:[%s3 + $0x8] sm:$0x3f] %v143
  // Predicated region
  $region14: #{riabnet_forward.12} parent=0 // pred_check
    _
  $region15: #{riabnet_forward.12} parent=0 // pred_check_branch
    %147 = sbr.rel (0) target = $region17
  $region16: #{riabnet_forward.12} parent=0 // pred_region
    _
  $region17: #{riabnet_forward.12} parent=0 // pred_fallthru
    _
  // Predicated region
  $region18: #{riabnet_forward.12} parent=0 // pred_check
    _
  $region19: #{riabnet_forward.12} parent=0 // pred_check_branch
    %149 = sbr.rel (0) target = $region21
  $region20: #{riabnet_forward.12} parent=0 // pred_region
    _
  $region21: #{riabnet_forward.12} parent=0 // pred_fallthru
    _

// kernel: riabnet_forward.13
$region0: #{riabnet_forward.13}
  #allocation0 [shape = 'u32[]', space=smem, size = 0x4, offset = 0x4, fixed_abs, tag = 'smem constant byte address 0x4 - core index']
  #allocation1 [shape = 'u32[144,128]{1,0:T(1,128)}', space=vmem, size = 0x12000, scoped, tag = 'internal scratch']
  %s0 = inlined_call_operand.vmem [shape: f32[6,24], index: 0, kind: input, shape index: {}]
  %s1 = inlined_call_operand.vmem [shape: f32[24,256], index: 1, kind: input, shape index: {}]
  %s2 = inlined_call_operand.vmem [shape: f32[6,1], index: 2, kind: input, shape index: {}]
  %s3 = inlined_call_operand.vmem [shape: f32[6,256], index: 3, kind: output, shape index: {}]
  %s4 = sld [smem:[#allocation0]]
  $region22: #{riabnet_forward.13} parent=0
    _
  %s6 = ssub.s32 1, %s4
  %s7 = scalar_select 0, %s6, %s4
  // Predicated region
  $region2: #{riabnet_forward.13} parent=0 // pred_check
    _
  $region3: #{riabnet_forward.13} parent=0 // pred_check_branch
    %9 = sbr.rel (0) target = $region5
  $region4: #{riabnet_forward.13} parent=0 // pred_region
    _
  $region5: #{riabnet_forward.13} parent=0 // pred_fallthru
    _
  // Predicated region
  $region6: #{riabnet_forward.13} parent=0 // pred_check
    _
  $region7: #{riabnet_forward.13} parent=0 // pred_check_branch
    %11 = sbr.rel (0) target = $region9
  $region8: #{riabnet_forward.13} parent=0 // pred_region
    _
  $region9: #{riabnet_forward.13} parent=0 // pred_fallthru
    _
  // Predicated region
  $region10: #{riabnet_forward.13} parent=0 // pred_check
    _
  $region11: #{riabnet_forward.13} parent=0 // pred_check_branch
    %13 = sbr.rel (0) target = $region13
  $region12: #{riabnet_forward.13} parent=0 // pred_region
    _
  $region13: #{riabnet_forward.13} parent=0 // pred_fallthru
    _
  %v14 = vld [vmem:[%s0] sm:$0x3f]
  %v15 = vld [vmem:[%s1] sm:$0xff]
  %v16 = vld [vmem:[%s1 + $0x8] sm:$0xff]
  %v17 = vld [vmem:[%s1 + $0x10] sm:$0xff]
  %v18 = vld [vmem:[%s1 + $0x18] sm:$0xff]
  %v19 = vld [vmem:[%s1 + $0x20] sm:$0xff]
  %v20 = vld [vmem:[%s1 + $0x28] sm:$0xff]
  %v21 = vld [vmem:[%s2] sm:$0x3f]
  %23 = vset.pattern.permute.xlu0 0
  %24 = vperm.xlu0 %23, %v21
  %v25 = vpop.permute.xlu0 %24
  %vm27 = vcmask 195584
  %v29 = vsel %vm27, %v14, 0
  %31 = vmatprep.subr.mxu0 0.0
  %32 = vmatpush1.msra.mxu0 0.0
  %33 = vmatprep.subr.mxu0 0.0
  %34 = vmatpush1.msra.mxu0 0.0
  %35 = vmatprep.subr.mxu0 0.0
  %36 = vmatpush1.msra.mxu0 0.0
  %37 = vmatprep.subr.mxu0 0.0
  %38 = vmatpush1.msra.mxu0 0.0
  %39 = vmatprep.subr.mxu0 0.0
  %40 = vmatpush1.msra.mxu0 0.0
  %41 = vmatprep.subr.mxu0 0.0
  %42 = vmatpush1.msra.mxu0 0.0
  %43 = vmatprep.subr.mxu0 0.0
  %44 = vmatpush1.msra.mxu0 0.0
  %45 = vmatprep.subr.mxu0 0.0
  %46 = vmatpush1.msra.mxu0 0.0
  %47 = vmatprep.subr.mxu0 0.0
  %48 = vmatpush1.msra.mxu0 0.0
  %49 = vmatprep.subr.mxu0 0.0
  %50 = vmatpush1.msra.mxu0 0.0
  %51 = vmatprep.subr.mxu0 0.0
  %52 = vmatpush1.msra.mxu0 0.0
  %53 = vmatprep.subr.mxu0 0.0
  %54 = vmatpush1.msra.mxu0 0.0
  %55 = vmatprep.subr.mxu0 0.0
  %56 = vmatpush1.msra.mxu0 0.0
  %57 = vmatprep.subr.mxu0 %v20
  %58 = vmatpush1.msra.mxu0 %v19
  %59 = vmatprep.subr.mxu0 %v18
  %60 = vmatpush1.msra.mxu0 %v17
  %61 = vmatprep.subr.mxu0 %v16
  %62 = vmatpush1.msra.mxu0 %v15
  %63 = vmatprep.subr.mxu0 0.0
  %64 = vmatpush2.msra.mxu0 0.0
  %65 = vmatprep.subr.mxu0 0.0
  %66 = vmatpush2.msra.mxu0 0.0
  %67 = vmatprep.subr.mxu0 0.0
  %68 = vmatpush2.msra.mxu0 0.0
  %69 = vmatprep.subr.mxu0 0.0
  %70 = vmatpush2.msra.mxu0 0.0
  %71 = vmatprep.subr.mxu0 0.0
  %72 = vmatpush2.msra.mxu0 0.0
  %73 = vmatprep.subr.mxu0 0.0
  %74 = vmatpush2.msra.mxu0 0.0
  %75 = vmatprep.subr.mxu0 0.0
  %76 = vmatpush2.msra.mxu0 0.0
  %77 = vmatprep.subr.mxu0 0.0
  %78 = vmatpush2.msra.mxu0 0.0
  %79 = vmatprep.subr.mxu0 0.0
  %80 = vmatpush2.msra.mxu0 0.0
  %81 = vmatprep.subr.mxu0 0.0
  %82 = vmatpush2.msra.mxu0 0.0
  %83 = vmatprep.subr.mxu0 0.0
  %84 = vmatpush2.msra.mxu0 0.0
  %85 = vmatprep.subr.mxu0 0.0
  %86 = vmatpush2.msra.mxu0 0.0
  %87 = vmatprep.subr.mxu0 0.0
  %88 = vmatpush2.msra.mxu0 0.0
  %89 = vmatprep.subr.mxu0 0.0
  %90 = vmatpush2.msra.mxu0 0.0
  %91 = vmatprep.subr.mxu0 0.0
  %92 = vmatpush2.msra.mxu0 0.0
  %93 = vmatprep.subr.mxu0 0.0
  %94 = vmatpush2.msra.mxu0 0.0
  %95 = vmatprep.mubr.f32.mxu0 0.0
  %96 = vmatmul.mubr.f32.gmra.mxu0 %v29
  %v97 = vpop.f32.mrf.mxu0
  %v98 = vadd.f32 %v25, %v97
  %v99 = vpop.f32.mrf.mxu0
  %v100 = vadd.f32 %v25, %v99
  %101 = vdwg.mxu0
  %v102 = vmax.f32 %v98, 0.0
  %v103 = vmax.f32 %v100, 0.0
  %104 = vst [vmem:[%s3] sm:$0x3f] %v102
  %105 = vst [vmem:[%s3 + $0x8] sm:$0x3f] %v103
  // Predicated region
  $region14: #{riabnet_forward.13} parent=0 // pred_check
    _
  $region15: #{riabnet_forward.13} parent=0 // pred_check_branch
    %107 = sbr.rel (0) target = $region17
  $region16: #{riabnet_forward.13} parent=0 // pred_region
    _
  $region17: #{riabnet_forward.13} parent=0 // pred_fallthru
    _
  // Predicated region
  $region18: #{riabnet_forward.13} parent=0 // pred_check
    _
  $region19: #{riabnet_forward.13} parent=0 // pred_check_branch
    %109 = sbr.rel (0) target = $region21
  $region20: #{riabnet_forward.13} parent=0 // pred_region
    _
  $region21: #{riabnet_forward.13} parent=0 // pred_fallthru
    _

// kernel: riabnet_forward.14
$region0: #{riabnet_forward.14}
  #allocation0 [shape = 'u32[]', space=smem, size = 0x4, offset = 0x4, fixed_abs, tag = 'smem constant byte address 0x4 - core index']
  #allocation1 [shape = 'u32[144,128]{1,0:T(1,128)}', space=vmem, size = 0x12000, scoped, tag = 'internal scratch']
  %s0 = inlined_call_operand.vmem [shape: f32[6,54], index: 0, kind: input, shape index: {}]
  %s1 = inlined_call_operand.vmem [shape: f32[54,256], index: 1, kind: input, shape index: {}]
  %s2 = inlined_call_operand.vmem [shape: f32[6,1], index: 2, kind: input, shape index: {}]
  %s3 = inlined_call_operand.vmem [shape: f32[6,256], index: 3, kind: input, shape index: {}]
  %s4 = inlined_call_operand.vmem [shape: f32[6,256], index: 4, kind: output, shape index: {}]
  %s5 = sld [smem:[#allocation0]]
  $region26: #{riabnet_forward.14} parent=0
    _
  %s7 = ssub.s32 1, %s5
  %s8 = scalar_select 0, %s7, %s5
  // Predicated region
  $region2: #{riabnet_forward.14} parent=0 // pred_check
    _
  $region3: #{riabnet_forward.14} parent=0 // pred_check_branch
    %10 = sbr.rel (0) target = $region5
  $region4: #{riabnet_forward.14} parent=0 // pred_region
    _
  $region5: #{riabnet_forward.14} parent=0 // pred_fallthru
    _
  // Predicated region
  $region6: #{riabnet_forward.14} parent=0 // pred_check
    _
  $region7: #{riabnet_forward.14} parent=0 // pred_check_branch
    %12 = sbr.rel (0) target = $region9
  $region8: #{riabnet_forward.14} parent=0 // pred_region
    _
  $region9: #{riabnet_forward.14} parent=0 // pred_fallthru
    _
  // Predicated region
  $region10: #{riabnet_forward.14} parent=0 // pred_check
    _
  $region11: #{riabnet_forward.14} parent=0 // pred_check_branch
    %14 = sbr.rel (0) target = $region13
  $region12: #{riabnet_forward.14} parent=0 // pred_region
    _
  $region13: #{riabnet_forward.14} parent=0 // pred_fallthru
    _
  // Predicated region
  $region14: #{riabnet_forward.14} parent=0 // pred_check
    _
  $region15: #{riabnet_forward.14} parent=0 // pred_check_branch
    %16 = sbr.rel (0) target = $region17
  $region16: #{riabnet_forward.14} parent=0 // pred_region
    _
  $region17: #{riabnet_forward.14} parent=0 // pred_fallthru
    _
  %v17 = vld [vmem:[%s0] sm:$0x3f]
  %v18 = vld [vmem:[%s1] sm:$0xff]
  %v19 = vld [vmem:[%s1 + $0x8] sm:$0xff]
  %v20 = vld [vmem:[%s1 + $0x10] sm:$0xff]
  %v21 = vld [vmem:[%s1 + $0x18] sm:$0xff]
  %v22 = vld [vmem:[%s1 + $0x20] sm:$0xff]
  %v23 = vld [vmem:[%s1 + $0x28] sm:$0xff]
  %v24 = vld [vmem:[%s1 + $0x30] sm:$0xff]
  %v25 = vld [vmem:[%s1 + $0x38] sm:$0xff]
  %v26 = vld [vmem:[%s1 + $0x40] sm:$0xff]
  %v27 = vld [vmem:[%s1 + $0x48] sm:$0xff]
  %v28 = vld [vmem:[%s1 + $0x50] sm:$0xff]
  %v29 = vld [vmem:[%s1 + $0x58] sm:$0xff]
  %v30 = vld [vmem:[%s1 + $0x60] sm:$0x3f]
  %v31 = vld [vmem:[%s1 + $0x68] sm:$0x3f]
  %v32 = vld [vmem:[%s2] sm:$0x3f]
  %34 = vset.pattern.permute.xlu0 0
  %35 = vperm.xlu0 %34, %v32
  %v36 = vpop.permute.xlu0 %35
  %vm38 = vcmask 441344
  %v40 = vsel %vm38, %v17, 0
  %vm42 = vcmask 1045504
  %v44 = vsel %vm42, %v30, 0
  %v47 = vsel %vm42, %v31, 0
  %49 = vmatprep.subr.mxu0 0.0
  %50 = vmatpush1.msra.mxu0 0.0
  %51 = vmatprep.subr.mxu0 0.0
  %52 = vmatpush1.msra.mxu0 0.0
  %53 = vmatprep.subr.mxu0 0.0
  %54 = vmatpush1.msra.mxu0 0.0
  %55 = vmatprep.subr.mxu0 0.0
  %56 = vmatpush1.msra.mxu0 0.0
  %57 = vmatprep.subr.mxu0 0.0
  %58 = vmatpush1.msra.mxu0 0.0
  %59 = vmatprep.subr.mxu0 0.0
  %60 = vmatpush1.msra.mxu0 0.0
  %61 = vmatprep.subr.mxu0 0.0
  %62 = vmatpush1.msra.mxu0 0.0
  %63 = vmatprep.subr.mxu0 0.0
  %64 = vmatpush1.msra.mxu0 0.0
  %65 = vmatprep.subr.mxu0 0.0
  %66 = vmatpush1.msra.mxu0 0.0
  %67 = vmatprep.subr.mxu0 %v47
  %68 = vmatpush1.msra.mxu0 %v44
  %69 = vmatprep.subr.mxu0 %v29
  %70 = vmatpush1.msra.mxu0 %v28
  %71 = vmatprep.subr.mxu0 %v27
  %72 = vmatpush1.msra.mxu0 %v26
  %73 = vmatprep.subr.mxu0 %v25
  %74 = vmatpush1.msra.mxu0 %v24
  %75 = vmatprep.subr.mxu0 %v23
  %76 = vmatpush1.msra.mxu0 %v22
  %77 = vmatprep.subr.mxu0 %v21
  %78 = vmatpush1.msra.mxu0 %v20
  %79 = vmatprep.subr.mxu0 %v19
  %80 = vmatpush1.msra.mxu0 %v18
  %81 = vmatprep.subr.mxu0 0.0
  %82 = vmatpush2.msra.mxu0 0.0
  %83 = vmatprep.subr.mxu0 0.0
  %84 = vmatpush2.msra.mxu0 0.0
  %85 = vmatprep.subr.mxu0 0.0
  %86 = vmatpush2.msra.mxu0 0.0
  %87 = vmatprep.subr.mxu0 0.0
  %88 = vmatpush2.msra.mxu0 0.0
  %89 = vmatprep.subr.mxu0 0.0
  %90 = vmatpush2.msra.mxu0 0.0
  %91 = vmatprep.subr.mxu0 0.0
  %92 = vmatpush2.msra.mxu0 0.0
  %93 = vmatprep.subr.mxu0 0.0
  %94 = vmatpush2.msra.mxu0 0.0
  %95 = vmatprep.subr.mxu0 0.0
  %96 = vmatpush2.msra.mxu0 0.0
  %97 = vmatprep.subr.mxu0 0.0
  %98 = vmatpush2.msra.mxu0 0.0
  %99 = vmatprep.subr.mxu0 0.0
  %100 = vmatpush2.msra.mxu0 0.0
  %101 = vmatprep.subr.mxu0 0.0
  %102 = vmatpush2.msra.mxu0 0.0
  %103 = vmatprep.subr.mxu0 0.0
  %104 = vmatpush2.msra.mxu0 0.0
  %105 = vmatprep.subr.mxu0 0.0
  %106 = vmatpush2.msra.mxu0 0.0
  %107 = vmatprep.subr.mxu0 0.0
  %108 = vmatpush2.msra.mxu0 0.0
  %109 = vmatprep.subr.mxu0 0.0
  %110 = vmatpush2.msra.mxu0 0.0
  %111 = vmatprep.subr.mxu0 0.0
  %112 = vmatpush2.msra.mxu0 0.0
  %113 = vmatprep.mubr.f32.mxu0 0.0
  %114 = vmatmul.mubr.f32.gmra.mxu0 %v40
  %v115 = vpop.f32.mrf.mxu0
  %v116 = vadd.f32 %v36, %v115
  %v117 = vpop.f32.mrf.mxu0
  %v118 = vadd.f32 %v36, %v117
  %119 = vdwg.mxu0
  %v120 = vld [vmem:[%s3] sm:$0x3f]
  %v121 = vld [vmem:[%s3 + $0x8] sm:$0x3f]
  %v122 = vadd.f32 %v116, %v120
  %v123 = vadd.f32 %v118, %v121
  %v124 = vmax.f32 %v122, 0.0
  %v125 = vmax.f32 %v123, 0.0
  %126 = vst [vmem:[%s4] sm:$0x3f] %v124
  %127 = vst [vmem:[%s4 + $0x8] sm:$0x3f] %v125
  // Predicated region
  $region18: #{riabnet_forward.14} parent=0 // pred_check
    _
  $region19: #{riabnet_forward.14} parent=0 // pred_check_branch
    %129 = sbr.rel (0) target = $region21
  $region20: #{riabnet_forward.14} parent=0 // pred_region
    _
  $region21: #{riabnet_forward.14} parent=0 // pred_fallthru
    _
  // Predicated region
  $region22: #{riabnet_forward.14} parent=0 // pred_check
    _
  $region23: #{riabnet_forward.14} parent=0 // pred_check_branch
    %131 = sbr.rel (0) target = $region25
  $region24: #{riabnet_forward.14} parent=0 // pred_region
    _
  $region25: #{riabnet_forward.14} parent=0 // pred_fallthru
    _

// kernel: riabnet_forward.15
$region0: #{riabnet_forward.15}
  #allocation0 [shape = 'u32[]', space=smem, size = 0x4, offset = 0x4, fixed_abs, tag = 'smem constant byte address 0x4 - core index']
  #allocation1 [shape = 'u32[144,128]{1,0:T(1,128)}', space=vmem, size = 0x12000, scoped, tag = 'internal scratch']
  %s0 = inlined_call_operand.vmem [shape: f32[15,54], index: 0, kind: input, shape index: {}]
  %s1 = inlined_call_operand.vmem [shape: f32[54,64], index: 1, kind: input, shape index: {}]
  %s2 = inlined_call_operand.vmem [shape: f32[15,1], index: 2, kind: input, shape index: {}]
  %s3 = inlined_call_operand.vmem [shape: f32[15,64], index: 3, kind: output, shape index: {}]
  %s4 = sld [smem:[#allocation0]]
  $region22: #{riabnet_forward.15} parent=0
    _
  %s6 = ssub.s32 1, %s4
  %s7 = scalar_select 0, %s6, %s4
  // Predicated region
  $region2: #{riabnet_forward.15} parent=0 // pred_check
    _
  $region3: #{riabnet_forward.15} parent=0 // pred_check_branch
    %9 = sbr.rel (0) target = $region5
  $region4: #{riabnet_forward.15} parent=0 // pred_region
    _
  $region5: #{riabnet_forward.15} parent=0 // pred_fallthru
    _
  // Predicated region
  $region6: #{riabnet_forward.15} parent=0 // pred_check
    _
  $region7: #{riabnet_forward.15} parent=0 // pred_check_branch
    %11 = sbr.rel (0) target = $region9
  $region8: #{riabnet_forward.15} parent=0 // pred_region
    _
  $region9: #{riabnet_forward.15} parent=0 // pred_fallthru
    _
  // Predicated region
  $region10: #{riabnet_forward.15} parent=0 // pred_check
    _
  $region11: #{riabnet_forward.15} parent=0 // pred_check_branch
    %13 = sbr.rel (0) target = $region13
  $region12: #{riabnet_forward.15} parent=0 // pred_region
    _
  $region13: #{riabnet_forward.15} parent=0 // pred_fallthru
    _
  %v14 = vld [vmem:[%s0] sm:$0xff]
  %v15 = vld [vmem:[%s0 + $0x8] sm:$0x7f]
  %v16 = vld [vmem:[%s1] sm:$0xff]
  %v17 = vld [vmem:[%s1 + $0x8] sm:$0xff]
  %v18 = vld [vmem:[%s1 + $0x10] sm:$0xff]
  %v19 = vld [vmem:[%s1 + $0x18] sm:$0xff]
  %v20 = vld [vmem:[%s1 + $0x20] sm:$0xff]
  %v21 = vld [vmem:[%s1 + $0x28] sm:$0xff]
  %v22 = vld [vmem:[%s1 + $0x30] sm:$0x3f]
  %v23 = vld [vmem:[%s2] sm:$0xff]
  %v24 = vld [vmem:[%s2 + $0x8] sm:$0x7f]
  %26 = vset.pattern.permute.xlu0 0
  %27 = vperm.xlu0 %26, %v23
  %v28 = vpop.permute.xlu0 %27
  %31 = vset.pattern.permute.xlu0 0
  %32 = vperm.xlu0 %31, %v24
  %v33 = vpop.permute.xlu0 %32
  %vm35 = vcmask 441344
  %v37 = vsel %vm35, %v14, 0
  %v40 = vsel %vm35, %v15, 0
  %vm42 = vcmask 1045504
  %v44 = vsel %vm42, %v22, 0
  %46 = vmatprep.subr.mxu0 0.0
  %47 = vmatpush1.msra.mxu0 0.0
  %48 = vmatprep.subr.mxu0 0.0
  %49 = vmatpush1.msra.mxu0 0.0
  %50 = vmatprep.subr.mxu0 0.0
  %51 = vmatpush1.msra.mxu0 0.0
  %52 = vmatprep.subr.mxu0 0.0
  %53 = vmatpush1.msra.mxu0 0.0
  %54 = vmatprep.subr.mxu0 0.0
  %55 = vmatpush1.msra.mxu0 0.0
  %56 = vmatprep.subr.mxu0 0.0
  %57 = vmatpush1.msra.mxu0 0.0
  %58 = vmatprep.subr.mxu0 0.0
  %59 = vmatpush1.msra.mxu0 0.0
  %60 = vmatprep.subr.mxu0 0.0
  %61 = vmatpush1.msra.mxu0 0.0
  %62 = vmatprep.subr.mxu0 0.0
  %63 = vmatpush1.msra.mxu0 0.0
  %64 = vmatprep.subr.mxu0 0.0
  %65 = vmatpush1.msra.mxu0 %v44
  %66 = vmatprep.subr.mxu0 0.0
  %67 = vmatpush1.msra.mxu0 %v21
  %68 = vmatprep.subr.mxu0 0.0
  %69 = vmatpush1.msra.mxu0 %v20
  %70 = vmatprep.subr.mxu0 0.0
  %71 = vmatpush1.msra.mxu0 %v19
  %72 = vmatprep.subr.mxu0 0.0
  %73 = vmatpush1.msra.mxu0 %v18
  %74 = vmatprep.subr.mxu0 0.0
  %75 = vmatpush1.msra.mxu0 %v17
  %76 = vmatprep.subr.mxu0 0.0
  %77 = vmatpush1.msra.mxu0 %v16
  %78 = vmatprep.subr.mxu0 0.0
  %79 = vmatpush2.msra.mxu0 0.0
  %80 = vmatprep.subr.mxu0 0.0
  %81 = vmatpush2.msra.mxu0 0.0
  %82 = vmatprep.subr.mxu0 0.0
  %83 = vmatpush2.msra.mxu0 0.0
  %84 = vmatprep.subr.mxu0 0.0
  %85 = vmatpush2.msra.mxu0 0.0
  %86 = vmatprep.subr.mxu0 0.0
  %87 = vmatpush2.msra.mxu0 0.0
  %88 = vmatprep.subr.mxu0 0.0
  %89 = vmatpush2.msra.mxu0 0.0
  %90 = vmatprep.subr.mxu0 0.0
  %91 = vmatpush2.msra.mxu0 0.0
  %92 = vmatprep.subr.mxu0 0.0
  %93 = vmatpush2.msra.mxu0 0.0
  %94 = vmatprep.subr.mxu0 0.0
  %95 = vmatpush2.msra.mxu0 0.0
  %96 = vmatprep.subr.mxu0 0.0
  %97 = vmatpush2.msra.mxu0 0.0
  %98 = vmatprep.subr.mxu0 0.0
  %99 = vmatpush2.msra.mxu0 0.0
  %100 = vmatprep.subr.mxu0 0.0
  %101 = vmatpush2.msra.mxu0 0.0
  %102 = vmatprep.subr.mxu0 0.0
  %103 = vmatpush2.msra.mxu0 0.0
  %104 = vmatprep.subr.mxu0 0.0
  %105 = vmatpush2.msra.mxu0 0.0
  %106 = vmatprep.subr.mxu0 0.0
  %107 = vmatpush2.msra.mxu0 0.0
  %108 = vmatprep.subr.mxu0 0.0
  %109 = vmatpush2.msra.mxu0 0.0
  %110 = vmatprep.mubr.f32.mxu0 0.0
  %111 = vmatmul.mubr.f32.gmra.mxu0 %v37
  %v112 = vpop.f32.mrf.mxu0
  %v113 = vadd.f32 %v28, %v112
  %v114 = vpop.f32.mrf.mxu0
  %115 = vmatprep.mubr.f32.mxu0 0.0
  %116 = vmatmul.mubr.f32.gmra.mxu0 %v40
  %v117 = vpop.f32.mrf.mxu0
  %v118 = vadd.f32 %v33, %v117
  %v119 = vpop.f32.mrf.mxu0
  %120 = vdwg.mxu0
  %v121 = vmax.f32 %v113, 0.0
  %v122 = vmax.f32 %v118, 0.0
  %vm123 = vcmask 523264
  %124 = vst.msk [vmem:[%s3] sm:$0xff] %vm123, %v121
  %vm125 = vcmask 522240
  %126 = vst.msk [vmem:[%s3 + $0x8] sm:$0x7f] %vm125, %v122
  // Predicated region
  $region14: #{riabnet_forward.15} parent=0 // pred_check
    _
  $region15: #{riabnet_forward.15} parent=0 // pred_check_branch
    %128 = sbr.rel (0) target = $region17
  $region16: #{riabnet_forward.15} parent=0 // pred_region
    _
  $region17: #{riabnet_forward.15} parent=0 // pred_fallthru
    _
  // Predicated region
  $region18: #{riabnet_forward.15} parent=0 // pred_check
    _
  $region19: #{riabnet_forward.15} parent=0 // pred_check_branch
    %130 = sbr.rel (0) target = $region21
  $region20: #{riabnet_forward.15} parent=0 // pred_region
    _
  $region21: #{riabnet_forward.15} parent=0 // pred_fallthru
    _

// kernel: riabnet_forward.16
$region0: #{riabnet_forward.16}
  #allocation0 [shape = 'u32[]', space=smem, size = 0x4, offset = 0x4, fixed_abs, tag = 'smem constant byte address 0x4 - core index']
  #allocation1 [shape = 'u32[144,128]{1,0:T(1,128)}', space=vmem, size = 0x12000, scoped, tag = 'internal scratch']
  %s0 = inlined_call_operand.vmem [shape: f32[4,4], index: 0, kind: input, shape index: {}]
  %s1 = inlined_call_operand.vmem [shape: f32[4,240], index: 1, kind: input, shape index: {}]
  %s2 = inlined_call_operand.vmem [shape: f32[4,240], index: 2, kind: output, shape index: {}]
  %s3 = sld [smem:[#allocation0]]
  $region18: #{riabnet_forward.16} parent=0
    _
  %s5 = ssub.s32 1, %s3
  %s6 = scalar_select 0, %s5, %s3
  // Predicated region
  $region2: #{riabnet_forward.16} parent=0 // pred_check
    _
  $region3: #{riabnet_forward.16} parent=0 // pred_check_branch
    %8 = sbr.rel (0) target = $region5
  $region4: #{riabnet_forward.16} parent=0 // pred_region
    _
  $region5: #{riabnet_forward.16} parent=0 // pred_fallthru
    _
  // Predicated region
  $region6: #{riabnet_forward.16} parent=0 // pred_check
    _
  $region7: #{riabnet_forward.16} parent=0 // pred_check_branch
    %10 = sbr.rel (0) target = $region9
  $region8: #{riabnet_forward.16} parent=0 // pred_region
    _
  $region9: #{riabnet_forward.16} parent=0 // pred_fallthru
    _
  %v11 = vld [vmem:[%s0] sm:$0xf]
  %v12 = vld [vmem:[%s1] sm:$0xff]
  %v14 = vcombine.high %v12, %v12
  %vm15 = vcmask 31744
  %v17 = vsel %vm15, %v11, 0
  %vm19 = vcmask 1043456
  %v20 = vsel %vm19, %v12, 0
  %v22 = vsel %vm19, %v14, 0
  %24 = vmatprep.subr.mxu0 0.0
  %25 = vmatpush1.msra.mxu0 0.0
  %26 = vmatprep.subr.mxu0 0.0
  %27 = vmatpush1.msra.mxu0 0.0
  %28 = vmatprep.subr.mxu0 0.0
  %29 = vmatpush1.msra.mxu0 0.0
  %30 = vmatprep.subr.mxu0 0.0
  %31 = vmatpush1.msra.mxu0 0.0
  %32 = vmatprep.subr.mxu0 0.0
  %33 = vmatpush1.msra.mxu0 0.0
  %34 = vmatprep.subr.mxu0 0.0
  %35 = vmatpush1.msra.mxu0 0.0
  %36 = vmatprep.subr.mxu0 0.0
  %37 = vmatpush1.msra.mxu0 0.0
  %38 = vmatprep.subr.mxu0 0.0
  %39 = vmatpush1.msra.mxu0 0.0
  %40 = vmatprep.subr.mxu0 0.0
  %41 = vmatpush1.msra.mxu0 0.0
  %42 = vmatprep.subr.mxu0 0.0
  %43 = vmatpush1.msra.mxu0 0.0
  %44 = vmatprep.subr.mxu0 0.0
  %45 = vmatpush1.msra.mxu0 0.0
  %46 = vmatprep.subr.mxu0 0.0
  %47 = vmatpush1.msra.mxu0 0.0
  %48 = vmatprep.subr.mxu0 0.0
  %49 = vmatpush1.msra.mxu0 0.0
  %50 = vmatprep.subr.mxu0 0.0
  %51 = vmatpush1.msra.mxu0 0.0
  %52 = vmatprep.subr.mxu0 0.0
  %53 = vmatpush1.msra.mxu0 0.0
  %54 = vmatprep.subr.mxu0 %v22
  %55 = vmatpush1.msra.mxu0 %v20
  %56 = vmatprep.subr.mxu0 0.0
  %57 = vmatpush2.msra.mxu0 0.0
  %58 = vmatprep.subr.mxu0 0.0
  %59 = vmatpush2.msra.mxu0 0.0
  %60 = vmatprep.subr.mxu0 0.0
  %61 = vmatpush2.msra.mxu0 0.0
  %62 = vmatprep.subr.mxu0 0.0
  %63 = vmatpush2.msra.mxu0 0.0
  %64 = vmatprep.subr.mxu0 0.0
  %65 = vmatpush2.msra.mxu0 0.0
  %66 = vmatprep.subr.mxu0 0.0
  %67 = vmatpush2.msra.mxu0 0.0
  %68 = vmatprep.subr.mxu0 0.0
  %69 = vmatpush2.msra.mxu0 0.0
  %70 = vmatprep.subr.mxu0 0.0
  %71 = vmatpush2.msra.mxu0 0.0
  %72 = vmatprep.subr.mxu0 0.0
  %73 = vmatpush2.msra.mxu0 0.0
  %74 = vmatprep.subr.mxu0 0.0
  %75 = vmatpush2.msra.mxu0 0.0
  %76 = vmatprep.subr.mxu0 0.0
  %77 = vmatpush2.msra.mxu0 0.0
  %78 = vmatprep.subr.mxu0 0.0
  %79 = vmatpush2.msra.mxu0 0.0
  %80 = vmatprep.subr.mxu0 0.0
  %81 = vmatpush2.msra.mxu0 0.0
  %82 = vmatprep.subr.mxu0 0.0
  %83 = vmatpush2.msra.mxu0 0.0
  %84 = vmatprep.subr.mxu0 0.0
  %85 = vmatpush2.msra.mxu0 0.0
  %86 = vmatprep.subr.mxu0 0.0
  %87 = vmatpush2.msra.mxu0 0.0
  %88 = vmatprep.mubr.f32.mxu0 0.0
  %89 = vmatmul.mubr.f32.gmra.mxu0 %v17
  %v90 = vpop.f32.mrf.mxu0
  %v91 = vadd.f32 0.0, %v90
  %v92 = vpop.f32.mrf.mxu0
  %v93 = vadd.f32 0.0, %v92
  %94 = vdwg.mxu0
  %v97 = vcombine.low %v91, %v93
  %vm99 = vcmask 916484
  %vm100 = vmor %vm99, %vm19
  %101 = vst.msk [vmem:[%s2] sm:$0xff] %vm100, %v97
  // Predicated region
  $region10: #{riabnet_forward.16} parent=0 // pred_check
    _
  $region11: #{riabnet_forward.16} parent=0 // pred_check_branch
    %103 = sbr.rel (0) target = $region13
  $region12: #{riabnet_forward.16} parent=0 // pred_region
    _
  $region13: #{riabnet_forward.16} parent=0 // pred_fallthru
    _
  // Predicated region
  $region14: #{riabnet_forward.16} parent=0 // pred_check
    _
  $region15: #{riabnet_forward.16} parent=0 // pred_check_branch
    %105 = sbr.rel (0) target = $region17
  $region16: #{riabnet_forward.16} parent=0 // pred_region
    _
  $region17: #{riabnet_forward.16} parent=0 // pred_fallthru
    _

// kernel: riabnet_forward.17
$region0: #{riabnet_forward.17}
  #allocation0 [shape = 'u32[]', space=smem, size = 0x4, offset = 0x4, fixed_abs, tag = 'smem constant byte address 0x4 - core index']
  #allocation1 [shape = 'u32[144,128]{1,0:T(1,128)}', space=vmem, size = 0x12000, scoped, tag = 'internal scratch']
  %s0 = inlined_call_operand.vmem [shape: f32[6,135], index: 0, kind: input, shape index: {}]
  %s1 = inlined_call_operand.vmem [shape: f32[135,256], index: 1, kind: input, shape index: {}]
  %s2 = inlined_call_operand.vmem [shape: f32[6,1], index: 2, kind: input, shape index: {}]
  %s3 = inlined_call_operand.vmem [shape: f32[6,256], index: 3, kind: output, shape index: {}]
  %s4 = sld [smem:[#allocation0]]
  $region22: #{riabnet_forward.17} parent=0
    _
  %s6 = ssub.s32 1, %s4
  %s7 = scalar_select 0, %s6, %s4
  // Predicated region
  $region2: #{riabnet_forward.17} parent=0 // pred_check
    _
  $region3: #{riabnet_forward.17} parent=0 // pred_check_branch
    %9 = sbr.rel (0) target = $region5
  $region4: #{riabnet_forward.17} parent=0 // pred_region
    _
  $region5: #{riabnet_forward.17} parent=0 // pred_fallthru
    _
  // Predicated region
  $region6: #{riabnet_forward.17} parent=0 // pred_check
    _
  $region7: #{riabnet_forward.17} parent=0 // pred_check_branch
    %11 = sbr.rel (0) target = $region9
  $region8: #{riabnet_forward.17} parent=0 // pred_region
    _
  $region9: #{riabnet_forward.17} parent=0 // pred_fallthru
    _
  // Predicated region
  $region10: #{riabnet_forward.17} parent=0 // pred_check
    _
  $region11: #{riabnet_forward.17} parent=0 // pred_check_branch
    %13 = sbr.rel (0) target = $region13
  $region12: #{riabnet_forward.17} parent=0 // pred_region
    _
  $region13: #{riabnet_forward.17} parent=0 // pred_fallthru
    _
  %v14 = vld [vmem:[%s0] sm:$0x3f]
  %v15 = vld [vmem:[%s0 + $0x8] sm:$0x3f]
  %v16 = vld [vmem:[%s1] sm:$0xff]
  %v17 = vld [vmem:[%s1 + $0x8] sm:$0xff]
  %v18 = vld [vmem:[%s1 + $0x10] sm:$0xff]
  %v19 = vld [vmem:[%s1 + $0x18] sm:$0xff]
  %v20 = vld [vmem:[%s1 + $0x20] sm:$0xff]
  %v21 = vld [vmem:[%s1 + $0x28] sm:$0xff]
  %v22 = vld [vmem:[%s1 + $0x30] sm:$0xff]
  %v23 = vld [vmem:[%s1 + $0x38] sm:$0xff]
  %v24 = vld [vmem:[%s1 + $0x40] sm:$0xff]
  %v25 = vld [vmem:[%s1 + $0x48] sm:$0xff]
  %v26 = vld [vmem:[%s1 + $0x50] sm:$0xff]
  %v27 = vld [vmem:[%s1 + $0x58] sm:$0xff]
  %v28 = vld [vmem:[%s1 + $0x60] sm:$0xff]
  %v29 = vld [vmem:[%s1 + $0x68] sm:$0xff]
  %v30 = vld [vmem:[%s1 + $0x70] sm:$0xff]
  %v31 = vld [vmem:[%s1 + $0x78] sm:$0xff]
  %v32 = vld [vmem:[%s1 + $0x80] sm:$0xff]
  %v33 = vld [vmem:[%s1 + $0x88] sm:$0xff]
  %v34 = vld [vmem:[%s1 + $0x90] sm:$0xff]
  %v35 = vld [vmem:[%s1 + $0x98] sm:$0xff]
  %v36 = vld [vmem:[%s1 + $0xa0] sm:$0xff]
  %v37 = vld [vmem:[%s1 + $0xa8] sm:$0xff]
  %v38 = vld [vmem:[%s1 + $0xb0] sm:$0xff]
  %v39 = vld [vmem:[%s1 + $0xb8] sm:$0xff]
  %v40 = vld [vmem:[%s1 + $0xc0] sm:$0xff]
  %v41 = vld [vmem:[%s1 + $0xc8] sm:$0xff]
  %v42 = vld [vmem:[%s1 + $0xd0] sm:$0xff]
  %v43 = vld [vmem:[%s1 + $0xd8] sm:$0xff]
  %v44 = vld [vmem:[%s1 + $0xe0] sm:$0xff]
  %v45 = vld [vmem:[%s1 + $0xe8] sm:$0xff]
  %v46 = vld [vmem:[%s1 + $0xf0] sm:$0xff]
  %v47 = vld [vmem:[%s1 + $0xf8] sm:$0xff]
  %v48 = vld [vmem:[%s1 + $0x100] sm:$0x7f]
  %v49 = vld [vmem:[%s1 + $0x108] sm:$0x7f]
  %v50 = vld [vmem:[%s2] sm:$0x3f]
  %52 = vset.pattern.permute.xlu0 0
  %53 = vperm.xlu0 %52, %v50
  %v54 = vpop.permute.xlu0 %53
  %vm56 = vcmask 56320
  %v58 = vsel %vm56, %v15, 0
  %vm60 = vcmask 1046528
  %v62 = vsel %vm60, %v48, 0
  %v65 = vsel %vm60, %v49, 0
  %67 = vmatprep.subr.mxu0 %v47
  %68 = vmatpush1.msra.mxu0 %v46
  %69 = vmatprep.subr.mxu0 %v45
  %70 = vmatpush1.msra.mxu0 %v44
  %71 = vmatprep.subr.mxu0 %v43
  %72 = vmatpush1.msra.mxu0 %v42
  %73 = vmatprep.subr.mxu0 %v41
  %74 = vmatpush1.msra.mxu0 %v40
  %75 = vmatprep.subr.mxu0 %v39
  %76 = vmatpush1.msra.mxu0 %v38
  %77 = vmatprep.subr.mxu0 %v37
  %78 = vmatpush1.msra.mxu0 %v36
  %79 = vmatprep.subr.mxu0 %v35
  %80 = vmatpush1.msra.mxu0 %v34
  %81 = vmatprep.subr.mxu0 %v33
  %82 = vmatpush1.msra.mxu0 %v32
  %83 = vmatprep.subr.mxu0 %v31
  %84 = vmatpush1.msra.mxu0 %v30
  %85 = vmatprep.subr.mxu0 %v29
  %86 = vmatpush1.msra.mxu0 %v28
  %87 = vmatprep.subr.mxu0 %v27
  %88 = vmatpush1.msra.mxu0 %v26
  %89 = vmatprep.subr.mxu0 %v25
  %90 = vmatpush1.msra.mxu0 %v24
  %91 = vmatprep.subr.mxu0 %v23
  %92 = vmatpush1.msra.mxu0 %v22
  %93 = vmatprep.subr.mxu0 %v21
  %94 = vmatpush1.msra.mxu0 %v20
  %95 = vmatprep.subr.mxu0 %v19
  %96 = vmatpush1.msra.mxu0 %v18
  %97 = vmatprep.subr.mxu0 %v17
  %98 = vmatpush1.msra.mxu0 %v16
  %99 = vmatprep.subr.mxu0 0.0
  %100 = vmatpush2.msra.mxu0 0.0
  %101 = vmatprep.subr.mxu0 0.0
  %102 = vmatpush2.msra.mxu0 0.0
  %103 = vmatprep.subr.mxu0 0.0
  %104 = vmatpush2.msra.mxu0 0.0
  %105 = vmatprep.subr.mxu0 0.0
  %106 = vmatpush2.msra.mxu0 0.0
  %107 = vmatprep.subr.mxu0 0.0
  %108 = vmatpush2.msra.mxu0 0.0
  %109 = vmatprep.subr.mxu0 0.0
  %110 = vmatpush2.msra.mxu0 0.0
  %111 = vmatprep.subr.mxu0 0.0
  %112 = vmatpush2.msra.mxu0 0.0
  %113 = vmatprep.subr.mxu0 0.0
  %114 = vmatpush2.msra.mxu0 0.0
  %115 = vmatprep.subr.mxu0 0.0
  %116 = vmatpush2.msra.mxu0 0.0
  %117 = vmatprep.subr.mxu0 0.0
  %118 = vmatpush2.msra.mxu0 0.0
  %119 = vmatprep.subr.mxu0 0.0
  %120 = vmatpush2.msra.mxu0 0.0
  %121 = vmatprep.subr.mxu0 0.0
  %122 = vmatpush2.msra.mxu0 0.0
  %123 = vmatprep.subr.mxu0 0.0
  %124 = vmatpush2.msra.mxu0 0.0
  %125 = vmatprep.subr.mxu0 0.0
  %126 = vmatpush2.msra.mxu0 0.0
  %127 = vmatprep.subr.mxu0 0.0
  %128 = vmatpush2.msra.mxu0 0.0
  %129 = vmatprep.subr.mxu0 %v65
  %130 = vmatpush2.msra.mxu0 %v62
  %131 = vmatprep.mubr.f32.mxu0 %v58
  %132 = vmatmul.mubr.f32.gmra.mxu0 %v14
  %v133 = vpop.f32.mrf.mxu0
  %v134 = vadd.f32 %v54, %v133
  %v135 = vpop.f32.mrf.mxu0
  %v136 = vadd.f32 %v54, %v135
  %137 = vdwg.mxu0
  %v138 = vmax.f32 %v134, 0.0
  %v139 = vmax.f32 %v136, 0.0
  %140 = vst [vmem:[%s3] sm:$0x3f] %v138
  %141 = vst [vmem:[%s3 + $0x8] sm:$0x3f] %v139
  // Predicated region
  $region14: #{riabnet_forward.17} parent=0 // pred_check
    _
  $region15: #{riabnet_forward.17} parent=0 // pred_check_branch
    %143 = sbr.rel (0) target = $region17
  $region16: #{riabnet_forward.17} parent=0 // pred_region
    _
  $region17: #{riabnet_forward.17} parent=0 // pred_fallthru
    _
  // Predicated region
  $region18: #{riabnet_forward.17} parent=0 // pred_check
    _
  $region19: #{riabnet_forward.17} parent=0 // pred_check_branch
    %145 = sbr.rel (0) target = $region21
  $region20: #{riabnet_forward.17} parent=0 // pred_region
    _
  $region21: #{riabnet_forward.17} parent=0 // pred_fallthru
    _

// kernel: riabnet_forward.18
$region0: #{riabnet_forward.18}
  #allocation0 [shape = 'u32[]', space=smem, size = 0x4, offset = 0x4, fixed_abs, tag = 'smem constant byte address 0x4 - core index']
  #allocation1 [shape = 'u32[144,128]{1,0:T(1,128)}', space=vmem, size = 0x12000, scoped, tag = 'internal scratch']
  %s0 = inlined_call_operand.vmem [shape: f32[6,54], index: 0, kind: input, shape index: {}]
  %s1 = inlined_call_operand.vmem [shape: f32[54,256], index: 1, kind: input, shape index: {}]
  %s2 = inlined_call_operand.vmem [shape: f32[6,1], index: 2, kind: input, shape index: {}]
  %s3 = inlined_call_operand.vmem [shape: f32[6,256], index: 3, kind: output, shape index: {}]
  %s4 = sld [smem:[#allocation0]]
  $region22: #{riabnet_forward.18} parent=0
    _
  %s6 = ssub.s32 1, %s4
  %s7 = scalar_select 0, %s6, %s4
  // Predicated region
  $region2: #{riabnet_forward.18} parent=0 // pred_check
    _
  $region3: #{riabnet_forward.18} parent=0 // pred_check_branch
    %9 = sbr.rel (0) target = $region5
  $region4: #{riabnet_forward.18} parent=0 // pred_region
    _
  $region5: #{riabnet_forward.18} parent=0 // pred_fallthru
    _
  // Predicated region
  $region6: #{riabnet_forward.18} parent=0 // pred_check
    _
  $region7: #{riabnet_forward.18} parent=0 // pred_check_branch
    %11 = sbr.rel (0) target = $region9
  $region8: #{riabnet_forward.18} parent=0 // pred_region
    _
  $region9: #{riabnet_forward.18} parent=0 // pred_fallthru
    _
  // Predicated region
  $region10: #{riabnet_forward.18} parent=0 // pred_check
    _
  $region11: #{riabnet_forward.18} parent=0 // pred_check_branch
    %13 = sbr.rel (0) target = $region13
  $region12: #{riabnet_forward.18} parent=0 // pred_region
    _
  $region13: #{riabnet_forward.18} parent=0 // pred_fallthru
    _
  %v14 = vld [vmem:[%s0] sm:$0x3f]
  %v15 = vld [vmem:[%s1] sm:$0xff]
  %v16 = vld [vmem:[%s1 + $0x8] sm:$0xff]
  %v17 = vld [vmem:[%s1 + $0x10] sm:$0xff]
  %v18 = vld [vmem:[%s1 + $0x18] sm:$0xff]
  %v19 = vld [vmem:[%s1 + $0x20] sm:$0xff]
  %v20 = vld [vmem:[%s1 + $0x28] sm:$0xff]
  %v21 = vld [vmem:[%s1 + $0x30] sm:$0xff]
  %v22 = vld [vmem:[%s1 + $0x38] sm:$0xff]
  %v23 = vld [vmem:[%s1 + $0x40] sm:$0xff]
  %v24 = vld [vmem:[%s1 + $0x48] sm:$0xff]
  %v25 = vld [vmem:[%s1 + $0x50] sm:$0xff]
  %v26 = vld [vmem:[%s1 + $0x58] sm:$0xff]
  %v27 = vld [vmem:[%s1 + $0x60] sm:$0x3f]
  %v28 = vld [vmem:[%s1 + $0x68] sm:$0x3f]
  %v29 = vld [vmem:[%s2] sm:$0x3f]
  %31 = vset.pattern.permute.xlu0 0
  %32 = vperm.xlu0 %31, %v29
  %v33 = vpop.permute.xlu0 %32
  %vm35 = vcmask 441344
  %v37 = vsel %vm35, %v14, 0
  %vm39 = vcmask 1045504
  %v41 = vsel %vm39, %v27, 0
  %v44 = vsel %vm39, %v28, 0
  %46 = vmatprep.subr.mxu0 0.0
  %47 = vmatpush1.msra.mxu0 0.0
  %48 = vmatprep.subr.mxu0 0.0
  %49 = vmatpush1.msra.mxu0 0.0
  %50 = vmatprep.subr.mxu0 0.0
  %51 = vmatpush1.msra.mxu0 0.0
  %52 = vmatprep.subr.mxu0 0.0
  %53 = vmatpush1.msra.mxu0 0.0
  %54 = vmatprep.subr.mxu0 0.0
  %55 = vmatpush1.msra.mxu0 0.0
  %56 = vmatprep.subr.mxu0 0.0
  %57 = vmatpush1.msra.mxu0 0.0
  %58 = vmatprep.subr.mxu0 0.0
  %59 = vmatpush1.msra.mxu0 0.0
  %60 = vmatprep.subr.mxu0 0.0
  %61 = vmatpush1.msra.mxu0 0.0
  %62 = vmatprep.subr.mxu0 0.0
  %63 = vmatpush1.msra.mxu0 0.0
  %64 = vmatprep.subr.mxu0 %v44
  %65 = vmatpush1.msra.mxu0 %v41
  %66 = vmatprep.subr.mxu0 %v26
  %67 = vmatpush1.msra.mxu0 %v25
  %68 = vmatprep.subr.mxu0 %v24
  %69 = vmatpush1.msra.mxu0 %v23
  %70 = vmatprep.subr.mxu0 %v22
  %71 = vmatpush1.msra.mxu0 %v21
  %72 = vmatprep.subr.mxu0 %v20
  %73 = vmatpush1.msra.mxu0 %v19
  %74 = vmatprep.subr.mxu0 %v18
  %75 = vmatpush1.msra.mxu0 %v17
  %76 = vmatprep.subr.mxu0 %v16
  %77 = vmatpush1.msra.mxu0 %v15
  %78 = vmatprep.subr.mxu0 0.0
  %79 = vmatpush2.msra.mxu0 0.0
  %80 = vmatprep.subr.mxu0 0.0
  %81 = vmatpush2.msra.mxu0 0.0
  %82 = vmatprep.subr.mxu0 0.0
  %83 = vmatpush2.msra.mxu0 0.0
  %84 = vmatprep.subr.mxu0 0.0
  %85 = vmatpush2.msra.mxu0 0.0
  %86 = vmatprep.subr.mxu0 0.0
  %87 = vmatpush2.msra.mxu0 0.0
  %88 = vmatprep.subr.mxu0 0.0
  %89 = vmatpush2.msra.mxu0 0.0
  %90 = vmatprep.subr.mxu0 0.0
  %91 = vmatpush2.msra.mxu0 0.0
  %92 = vmatprep.subr.mxu0 0.0
  %93 = vmatpush2.msra.mxu0 0.0
  %94 = vmatprep.subr.mxu0 0.0
  %95 = vmatpush2.msra.mxu0 0.0
  %96 = vmatprep.subr.mxu0 0.0
  %97 = vmatpush2.msra.mxu0 0.0
  %98 = vmatprep.subr.mxu0 0.0
  %99 = vmatpush2.msra.mxu0 0.0
  %100 = vmatprep.subr.mxu0 0.0
  %101 = vmatpush2.msra.mxu0 0.0
  %102 = vmatprep.subr.mxu0 0.0
  %103 = vmatpush2.msra.mxu0 0.0
  %104 = vmatprep.subr.mxu0 0.0
  %105 = vmatpush2.msra.mxu0 0.0
  %106 = vmatprep.subr.mxu0 0.0
  %107 = vmatpush2.msra.mxu0 0.0
  %108 = vmatprep.subr.mxu0 0.0
  %109 = vmatpush2.msra.mxu0 0.0
  %110 = vmatprep.mubr.f32.mxu0 0.0
  %111 = vmatmul.mubr.f32.gmra.mxu0 %v37
  %v112 = vpop.f32.mrf.mxu0
  %v113 = vadd.f32 %v33, %v112
  %v114 = vpop.f32.mrf.mxu0
  %v115 = vadd.f32 %v33, %v114
  %116 = vdwg.mxu0
  %v117 = vmax.f32 %v113, 0.0
  %v118 = vmax.f32 %v115, 0.0
  %119 = vst [vmem:[%s3] sm:$0x3f] %v117
  %120 = vst [vmem:[%s3 + $0x8] sm:$0x3f] %v118
  // Predicated region
  $region14: #{riabnet_forward.18} parent=0 // pred_check
    _
  $region15: #{riabnet_forward.18} parent=0 // pred_check_branch
    %122 = sbr.rel (0) target = $region17
  $region16: #{riabnet_forward.18} parent=0 // pred_region
    _
  $region17: #{riabnet_forward.18} parent=0 // pred_fallthru
    _
  // Predicated region
  $region18: #{riabnet_forward.18} parent=0 // pred_check
    _
  $region19: #{riabnet_forward.18} parent=0 // pred_check_branch
    %124 = sbr.rel (0) target = $region21
  $region20: #{riabnet_forward.18} parent=0 // pred_region
    _
  $region21: #{riabnet_forward.18} parent=0 // pred_fallthru
    _

// kernel: riabnet_forward.19
$region0: #{riabnet_forward.19}
  #allocation0 [shape = 'u32[]', space=smem, size = 0x4, offset = 0x4, fixed_abs, tag = 'smem constant byte address 0x4 - core index']
  #allocation1 [shape = 'u32[144,128]{1,0:T(1,128)}', space=vmem, size = 0x12000, scoped, tag = 'internal scratch']
  %s0 = inlined_call_operand.vmem [shape: f32[6,24], index: 0, kind: input, shape index: {}]
  %s1 = inlined_call_operand.vmem [shape: f32[24,256], index: 1, kind: input, shape index: {}]
  %s2 = inlined_call_operand.vmem [shape: f32[6,1], index: 2, kind: input, shape index: {}]
  %s3 = inlined_call_operand.vmem [shape: f32[6,256], index: 3, kind: input, shape index: {}]
  %s4 = inlined_call_operand.vmem [shape: f32[6,256], index: 4, kind: output, shape index: {}]
  %s5 = sld [smem:[#allocation0]]
  $region26: #{riabnet_forward.19} parent=0
    _
  %s7 = ssub.s32 1, %s5
  %s8 = scalar_select 0, %s7, %s5
  // Predicated region
  $region2: #{riabnet_forward.19} parent=0 // pred_check
    _
  $region3: #{riabnet_forward.19} parent=0 // pred_check_branch
    %10 = sbr.rel (0) target = $region5
  $region4: #{riabnet_forward.19} parent=0 // pred_region
    _
  $region5: #{riabnet_forward.19} parent=0 // pred_fallthru
    _
  // Predicated region
  $region6: #{riabnet_forward.19} parent=0 // pred_check
    _
  $region7: #{riabnet_forward.19} parent=0 // pred_check_branch
    %12 = sbr.rel (0) target = $region9
  $region8: #{riabnet_forward.19} parent=0 // pred_region
    _
  $region9: #{riabnet_forward.19} parent=0 // pred_fallthru
    _
  // Predicated region
  $region10: #{riabnet_forward.19} parent=0 // pred_check
    _
  $region11: #{riabnet_forward.19} parent=0 // pred_check_branch
    %14 = sbr.rel (0) target = $region13
  $region12: #{riabnet_forward.19} parent=0 // pred_region
    _
  $region13: #{riabnet_forward.19} parent=0 // pred_fallthru
    _
  // Predicated region
  $region14: #{riabnet_forward.19} parent=0 // pred_check
    _
  $region15: #{riabnet_forward.19} parent=0 // pred_check_branch
    %16 = sbr.rel (0) target = $region17
  $region16: #{riabnet_forward.19} parent=0 // pred_region
    _
  $region17: #{riabnet_forward.19} parent=0 // pred_fallthru
    _
  %v17 = vld [vmem:[%s0] sm:$0x3f]
  %v18 = vld [vmem:[%s1] sm:$0xff]
  %v19 = vld [vmem:[%s1 + $0x8] sm:$0xff]
  %v20 = vld [vmem:[%s1 + $0x10] sm:$0xff]
  %v21 = vld [vmem:[%s1 + $0x18] sm:$0xff]
  %v22 = vld [vmem:[%s1 + $0x20] sm:$0xff]
  %v23 = vld [vmem:[%s1 + $0x28] sm:$0xff]
  %v24 = vld [vmem:[%s2] sm:$0x3f]
  %26 = vset.pattern.permute.xlu0 0
  %27 = vperm.xlu0 %26, %v24
  %v28 = vpop.permute.xlu0 %27
  %vm30 = vcmask 195584
  %v32 = vsel %vm30, %v17, 0
  %34 = vmatprep.subr.mxu0 0.0
  %35 = vmatpush1.msra.mxu0 0.0
  %36 = vmatprep.subr.mxu0 0.0
  %37 = vmatpush1.msra.mxu0 0.0
  %38 = vmatprep.subr.mxu0 0.0
  %39 = vmatpush1.msra.mxu0 0.0
  %40 = vmatprep.subr.mxu0 0.0
  %41 = vmatpush1.msra.mxu0 0.0
  %42 = vmatprep.subr.mxu0 0.0
  %43 = vmatpush1.msra.mxu0 0.0
  %44 = vmatprep.subr.mxu0 0.0
  %45 = vmatpush1.msra.mxu0 0.0
  %46 = vmatprep.subr.mxu0 0.0
  %47 = vmatpush1.msra.mxu0 0.0
  %48 = vmatprep.subr.mxu0 0.0
  %49 = vmatpush1.msra.mxu0 0.0
  %50 = vmatprep.subr.mxu0 0.0
  %51 = vmatpush1.msra.mxu0 0.0
  %52 = vmatprep.subr.mxu0 0.0
  %53 = vmatpush1.msra.mxu0 0.0
  %54 = vmatprep.subr.mxu0 0.0
  %55 = vmatpush1.msra.mxu0 0.0
  %56 = vmatprep.subr.mxu0 0.0
  %57 = vmatpush1.msra.mxu0 0.0
  %58 = vmatprep.subr.mxu0 0.0
  %59 = vmatpush1.msra.mxu0 0.0
  %60 = vmatprep.subr.mxu0 %v23
  %61 = vmatpush1.msra.mxu0 %v22
  %62 = vmatprep.subr.mxu0 %v21
  %63 = vmatpush1.msra.mxu0 %v20
  %64 = vmatprep.subr.mxu0 %v19
  %65 = vmatpush1.msra.mxu0 %v18
  %66 = vmatprep.subr.mxu0 0.0
  %67 = vmatpush2.msra.mxu0 0.0
  %68 = vmatprep.subr.mxu0 0.0
  %69 = vmatpush2.msra.mxu0 0.0
  %70 = vmatprep.subr.mxu0 0.0
  %71 = vmatpush2.msra.mxu0 0.0
  %72 = vmatprep.subr.mxu0 0.0
  %73 = vmatpush2.msra.mxu0 0.0
  %74 = vmatprep.subr.mxu0 0.0
  %75 = vmatpush2.msra.mxu0 0.0
  %76 = vmatprep.subr.mxu0 0.0
  %77 = vmatpush2.msra.mxu0 0.0
  %78 = vmatprep.subr.mxu0 0.0
  %79 = vmatpush2.msra.mxu0 0.0
  %80 = vmatprep.subr.mxu0 0.0
  %81 = vmatpush2.msra.mxu0 0.0
  %82 = vmatprep.subr.mxu0 0.0
  %83 = vmatpush2.msra.mxu0 0.0
  %84 = vmatprep.subr.mxu0 0.0
  %85 = vmatpush2.msra.mxu0 0.0
  %86 = vmatprep.subr.mxu0 0.0
  %87 = vmatpush2.msra.mxu0 0.0
  %88 = vmatprep.subr.mxu0 0.0
  %89 = vmatpush2.msra.mxu0 0.0
  %90 = vmatprep.subr.mxu0 0.0
  %91 = vmatpush2.msra.mxu0 0.0
  %92 = vmatprep.subr.mxu0 0.0
  %93 = vmatpush2.msra.mxu0 0.0
  %94 = vmatprep.subr.mxu0 0.0
  %95 = vmatpush2.msra.mxu0 0.0
  %96 = vmatprep.subr.mxu0 0.0
  %97 = vmatpush2.msra.mxu0 0.0
  %98 = vmatprep.mubr.f32.mxu0 0.0
  %99 = vmatmul.mubr.f32.gmra.mxu0 %v32
  %v100 = vpop.f32.mrf.mxu0
  %v101 = vadd.f32 %v28, %v100
  %v102 = vpop.f32.mrf.mxu0
  %v103 = vadd.f32 %v28, %v102
  %104 = vdwg.mxu0
  %v105 = vld [vmem:[%s3] sm:$0x3f]
  %v106 = vld [vmem:[%s3 + $0x8] sm:$0x3f]
  %v107 = vadd.f32 %v101, %v105
  %v108 = vadd.f32 %v103, %v106
  %v109 = vmax.f32 %v107, 0.0
  %v110 = vmax.f32 %v108, 0.0
  %111 = vst [vmem:[%s4] sm:$0x3f] %v109
  %112 = vst [vmem:[%s4 + $0x8] sm:$0x3f] %v110
  // Predicated region
  $region18: #{riabnet_forward.19} parent=0 // pred_check
    _
  $region19: #{riabnet_forward.19} parent=0 // pred_check_branch
    %114 = sbr.rel (0) target = $region21
  $region20: #{riabnet_forward.19} parent=0 // pred_region
    _
  $region21: #{riabnet_forward.19} parent=0 // pred_fallthru
    _
  // Predicated region
  $region22: #{riabnet_forward.19} parent=0 // pred_check
    _
  $region23: #{riabnet_forward.19} parent=0 // pred_check_branch
    %116 = sbr.rel (0) target = $region25
  $region24: #{riabnet_forward.19} parent=0 // pred_region
    _
  $region25: #{riabnet_forward.19} parent=0 // pred_fallthru
    _

// kernel: riabnet_forward.21
$region0: #{riabnet_forward.21}
  #allocation0 [shape = 'u32[]', space=smem, size = 0x4, offset = 0x4, fixed_abs, tag = 'smem constant byte address 0x4 - core index']
  #allocation1 [shape = 'u32[144,128]{1,0:T(1,128)}', space=vmem, size = 0x12000, scoped, tag = 'internal scratch']
  #allocation2 [shape = 'f32[1,1]{1,0:T(1,128)S(1)}', space=vmem, size = 0x200, scoped, tag = 'scoped memory for riabnet_forward.21']
  %s0 = inlined_call_operand.vmem [shape: f32[1,54], index: 0, kind: input, shape index: {}]
  %s1 = inlined_call_operand.vmem [shape: f32[54,1024], index: 1, kind: input, shape index: {}]
  %s2 = inlined_call_operand.<no memory space> [shape: f32[1,1], index: 2, kind: input, shape index: {}]
  %s3 = inlined_call_operand.vmem [shape: f32[1,1024], index: 3, kind: output, shape index: {}]
  %s4 = sld [smem:[#allocation0]]
  $region22: #{riabnet_forward.21} parent=0
    _
  %s6 = ssub.s32 1, %s4
  %s7 = scalar_select 0, %s6, %s4
  %v8 = vstv %s2
  %9 = vst [vmem:[#allocation2] sm:$0x1] %v8
  // Predicated region
  $region2: #{riabnet_forward.21} parent=0 // pred_check
    _
  $region3: #{riabnet_forward.21} parent=0 // pred_check_branch
    %11 = sbr.rel (0) target = $region5
  $region4: #{riabnet_forward.21} parent=0 // pred_region
    _
  $region5: #{riabnet_forward.21} parent=0 // pred_fallthru
    _
  // Predicated region
  $region6: #{riabnet_forward.21} parent=0 // pred_check
    _
  $region7: #{riabnet_forward.21} parent=0 // pred_check_branch
    %13 = sbr.rel (0) target = $region9
  $region8: #{riabnet_forward.21} parent=0 // pred_region
    _
  $region9: #{riabnet_forward.21} parent=0 // pred_fallthru
    _
  // Predicated region
  $region10: #{riabnet_forward.21} parent=0 // pred_check
    _
  $region11: #{riabnet_forward.21} parent=0 // pred_check_branch
    %15 = sbr.rel (0) target = $region13
  $region12: #{riabnet_forward.21} parent=0 // pred_region
    _
  $region13: #{riabnet_forward.21} parent=0 // pred_fallthru
    _
  %v16 = vld [vmem:[%s0] sm:$0x1]
  %v17 = vld [vmem:[%s1] sm:$0xff]
  %v18 = vld [vmem:[%s1 + $0x8] sm:$0xff]
  %v19 = vld [vmem:[%s1 + $0x10] sm:$0xff]
  %v20 = vld [vmem:[%s1 + $0x18] sm:$0xff]
  %v21 = vld [vmem:[%s1 + $0x20] sm:$0xff]
  %v22 = vld [vmem:[%s1 + $0x28] sm:$0xff]
  %v23 = vld [vmem:[%s1 + $0x30] sm:$0xff]
  %v24 = vld [vmem:[%s1 + $0x38] sm:$0xff]
  %v25 = vld [vmem:[%s1 + $0x40] sm:$0xff]
  %v26 = vld [vmem:[%s1 + $0x48] sm:$0xff]
  %v27 = vld [vmem:[%s1 + $0x50] sm:$0xff]
  %v28 = vld [vmem:[%s1 + $0x58] sm:$0xff]
  %v29 = vld [vmem:[%s1 + $0x60] sm:$0xff]
  %v30 = vld [vmem:[%s1 + $0x68] sm:$0xff]
  %v31 = vld [vmem:[%s1 + $0x70] sm:$0xff]
  %v32 = vld [vmem:[%s1 + $0x78] sm:$0xff]
  %v33 = vld [vmem:[%s1 + $0x80] sm:$0xff]
  %v34 = vld [vmem:[%s1 + $0x88] sm:$0xff]
  %v35 = vld [vmem:[%s1 + $0x90] sm:$0xff]
  %v36 = vld [vmem:[%s1 + $0x98] sm:$0xff]
  %v37 = vld [vmem:[%s1 + $0xa0] sm:$0xff]
  %v38 = vld [vmem:[%s1 + $0xa8] sm:$0xff]
  %v39 = vld [vmem:[%s1 + $0xb0] sm:$0xff]
  %v40 = vld [vmem:[%s1 + $0xb8] sm:$0xff]
  %v41 = vld [vmem:[%s1 + $0xc0] sm:$0xff]
  %v42 = vld [vmem:[%s1 + $0xc8] sm:$0xff]
  %v43 = vld [vmem:[%s1 + $0xd0] sm:$0xff]
  %v44 = vld [vmem:[%s1 + $0xd8] sm:$0xff]
  %v45 = vld [vmem:[%s1 + $0xe0] sm:$0xff]
  %v46 = vld [vmem:[%s1 + $0xe8] sm:$0xff]
  %v47 = vld [vmem:[%s1 + $0xf0] sm:$0xff]
  %v48 = vld [vmem:[%s1 + $0xf8] sm:$0xff]
  %v49 = vld [vmem:[%s1 + $0x100] sm:$0xff]
  %v50 = vld [vmem:[%s1 + $0x108] sm:$0xff]
  %v51 = vld [vmem:[%s1 + $0x110] sm:$0xff]
  %v52 = vld [vmem:[%s1 + $0x118] sm:$0xff]
  %v53 = vld [vmem:[%s1 + $0x120] sm:$0xff]
  %v54 = vld [vmem:[%s1 + $0x128] sm:$0xff]
  %v55 = vld [vmem:[%s1 + $0x130] sm:$0xff]
  %v56 = vld [vmem:[%s1 + $0x138] sm:$0xff]
  %v57 = vld [vmem:[%s1 + $0x140] sm:$0xff]
  %v58 = vld [vmem:[%s1 + $0x148] sm:$0xff]
  %v59 = vld [vmem:[%s1 + $0x150] sm:$0xff]
  %v60 = vld [vmem:[%s1 + $0x158] sm:$0xff]
  %v61 = vld [vmem:[%s1 + $0x160] sm:$0xff]
  %v62 = vld [vmem:[%s1 + $0x168] sm:$0xff]
  %v63 = vld [vmem:[%s1 + $0x170] sm:$0xff]
  %v64 = vld [vmem:[%s1 + $0x178] sm:$0xff]
  %v65 = vld [vmem:[%s1 + $0x180] sm:$0x3f]
  %v66 = vld [vmem:[%s1 + $0x188] sm:$0x3f]
  %v67 = vld [vmem:[%s1 + $0x190] sm:$0x3f]
  %v68 = vld [vmem:[%s1 + $0x198] sm:$0x3f]
  %v69 = vld [vmem:[%s1 + $0x1a0] sm:$0x3f]
  %v70 = vld [vmem:[%s1 + $0x1a8] sm:$0x3f]
  %v71 = vld [vmem:[%s1 + $0x1b0] sm:$0x3f]
  %v72 = vld [vmem:[%s1 + $0x1b8] sm:$0x3f]
  %v73 = vld [vmem:[#allocation2] sm:$0x1]
  %75 = vset.pattern.permute.xlu0 0
  %76 = vperm.xlu0 %75, %v73
  %v77 = vpop.permute.xlu0 %76
  %v79 = vlaneseq
  %v80 = vshrl.u32 %v79, 7
  %v81 = vsub.s32 0, %v80
  %v82 = vrot.slane %v77, %v81
  %vm83 = vcmask 441344
  %v85 = vsel %vm83, %v16, 0
  %vm87 = vcmask 1045504
  %v89 = vsel %vm87, %v65, 0
  %v92 = vsel %vm87, %v66, 0
  %v95 = vsel %vm87, %v67, 0
  %v98 = vsel %vm87, %v68, 0
  %v101 = vsel %vm87, %v69, 0
  %v104 = vsel %vm87, %v70, 0
  %v107 = vsel %vm87, %v71, 0
  %v110 = vsel %vm87, %v72, 0
  %112 = vmatprep.subr.mxu0 0.0
  %113 = vmatpush1.msra.mxu0 0.0
  %114 = vmatprep.subr.mxu0 0.0
  %115 = vmatpush1.msra.mxu0 0.0
  %116 = vmatprep.subr.mxu0 0.0
  %117 = vmatpush1.msra.mxu0 0.0
  %118 = vmatprep.subr.mxu0 0.0
  %119 = vmatpush1.msra.mxu0 0.0
  %120 = vmatprep.subr.mxu0 0.0
  %121 = vmatpush1.msra.mxu0 0.0
  %122 = vmatprep.subr.mxu0 0.0
  %123 = vmatpush1.msra.mxu0 0.0
  %124 = vmatprep.subr.mxu0 0.0
  %125 = vmatpush1.msra.mxu0 0.0
  %126 = vmatprep.subr.mxu0 0.0
  %127 = vmatpush1.msra.mxu0 0.0
  %128 = vmatprep.subr.mxu0 0.0
  %129 = vmatpush1.msra.mxu0 0.0
  %130 = vmatprep.subr.mxu0 %v92
  %131 = vmatpush1.msra.mxu0 %v89
  %132 = vmatprep.subr.mxu0 %v58
  %133 = vmatpush1.msra.mxu0 %v57
  %134 = vmatprep.subr.mxu0 %v50
  %135 = vmatpush1.msra.mxu0 %v49
  %136 = vmatprep.subr.mxu0 %v42
  %137 = vmatpush1.msra.mxu0 %v41
  %138 = vmatprep.subr.mxu0 %v34
  %139 = vmatpush1.msra.mxu0 %v33
  %140 = vmatprep.subr.mxu0 %v26
  %141 = vmatpush1.msra.mxu0 %v25
  %142 = vmatprep.subr.mxu0 %v18
  %143 = vmatpush1.msra.mxu0 %v17
  %144 = vmatprep.subr.mxu0 0.0
  %145 = vmatpush2.msra.mxu0 0.0
  %146 = vmatprep.subr.mxu0 0.0
  %147 = vmatpush2.msra.mxu0 0.0
  %148 = vmatprep.subr.mxu0 0.0
  %149 = vmatpush2.msra.mxu0 0.0
  %150 = vmatprep.subr.mxu0 0.0
  %151 = vmatpush2.msra.mxu0 0.0
  %152 = vmatprep.subr.mxu0 0.0
  %153 = vmatpush2.msra.mxu0 0.0
  %154 = vmatprep.subr.mxu0 0.0
  %155 = vmatpush2.msra.mxu0 0.0
  %156 = vmatprep.subr.mxu0 0.0
  %157 = vmatpush2.msra.mxu0 0.0
  %158 = vmatprep.subr.mxu0 0.0
  %159 = vmatpush2.msra.mxu0 0.0
  %160 = vmatprep.subr.mxu0 0.0
  %161 = vmatpush2.msra.mxu0 0.0
  %162 = vmatprep.subr.mxu0 0.0
  %163 = vmatpush2.msra.mxu0 0.0
  %164 = vmatprep.subr.mxu0 0.0
  %165 = vmatpush2.msra.mxu0 0.0
  %166 = vmatprep.subr.mxu0 0.0
  %167 = vmatpush2.msra.mxu0 0.0
  %168 = vmatprep.subr.mxu0 0.0
  %169 = vmatpush2.msra.mxu0 0.0
  %170 = vmatprep.subr.mxu0 0.0
  %171 = vmatpush2.msra.mxu0 0.0
  %172 = vmatprep.subr.mxu0 0.0
  %173 = vmatpush2.msra.mxu0 0.0
  %174 = vmatprep.subr.mxu0 0.0
  %175 = vmatpush2.msra.mxu0 0.0
  %176 = vmatprep.mubr.f32.mxu0 0.0
  %177 = vmatmul.mubr.f32.gmra.mxu0 %v85
  %v178 = vpop.f32.mrf.mxu0
  %v179 = vadd.f32 %v82, %v178
  %v180 = vpop.f32.mrf.mxu0
  %v181 = vadd.f32 %v82, %v180
  %182 = vdwg.mxu0
  %183 = vmatprep.subr.mxu0 0.0
  %184 = vmatpush1.msra.mxu0 0.0
  %185 = vmatprep.subr.mxu0 0.0
  %186 = vmatpush1.msra.mxu0 0.0
  %187 = vmatprep.subr.mxu0 0.0
  %188 = vmatpush1.msra.mxu0 0.0
  %189 = vmatprep.subr.mxu0 0.0
  %190 = vmatpush1.msra.mxu0 0.0
  %191 = vmatprep.subr.mxu0 0.0
  %192 = vmatpush1.msra.mxu0 0.0
  %193 = vmatprep.subr.mxu0 0.0
  %194 = vmatpush1.msra.mxu0 0.0
  %195 = vmatprep.subr.mxu0 0.0
  %196 = vmatpush1.msra.mxu0 0.0
  %197 = vmatprep.subr.mxu0 0.0
  %198 = vmatpush1.msra.mxu0 0.0
  %199 = vmatprep.subr.mxu0 0.0
  %200 = vmatpush1.msra.mxu0 0.0
  %201 = vmatprep.subr.mxu0 %v98
  %202 = vmatpush1.msra.mxu0 %v95
  %203 = vmatprep.subr.mxu0 %v60
  %204 = vmatpush1.msra.mxu0 %v59
  %205 = vmatprep.subr.mxu0 %v52
  %206 = vmatpush1.msra.mxu0 %v51
  %207 = vmatprep.subr.mxu0 %v44
  %208 = vmatpush1.msra.mxu0 %v43
  %209 = vmatprep.subr.mxu0 %v36
  %210 = vmatpush1.msra.mxu0 %v35
  %211 = vmatprep.subr.mxu0 %v28
  %212 = vmatpush1.msra.mxu0 %v27
  %213 = vmatprep.subr.mxu0 %v20
  %214 = vmatpush1.msra.mxu0 %v19
  %215 = vmatprep.subr.mxu0 0.0
  %216 = vmatpush2.msra.mxu0 0.0
  %217 = vmatprep.subr.mxu0 0.0
  %218 = vmatpush2.msra.mxu0 0.0
  %219 = vmatprep.subr.mxu0 0.0
  %220 = vmatpush2.msra.mxu0 0.0
  %221 = vmatprep.subr.mxu0 0.0
  %222 = vmatpush2.msra.mxu0 0.0
  %223 = vmatprep.subr.mxu0 0.0
  %224 = vmatpush2.msra.mxu0 0.0
  %225 = vmatprep.subr.mxu0 0.0
  %226 = vmatpush2.msra.mxu0 0.0
  %227 = vmatprep.subr.mxu0 0.0
  %228 = vmatpush2.msra.mxu0 0.0
  %229 = vmatprep.subr.mxu0 0.0
  %230 = vmatpush2.msra.mxu0 0.0
  %231 = vmatprep.subr.mxu0 0.0
  %232 = vmatpush2.msra.mxu0 0.0
  %233 = vmatprep.subr.mxu0 0.0
  %234 = vmatpush2.msra.mxu0 0.0
  %235 = vmatprep.subr.mxu0 0.0
  %236 = vmatpush2.msra.mxu0 0.0
  %237 = vmatprep.subr.mxu0 0.0
  %238 = vmatpush2.msra.mxu0 0.0
  %239 = vmatprep.subr.mxu0 0.0
  %240 = vmatpush2.msra.mxu0 0.0
  %241 = vmatprep.subr.mxu0 0.0
  %242 = vmatpush2.msra.mxu0 0.0
  %243 = vmatprep.subr.mxu0 0.0
  %244 = vmatpush2.msra.mxu0 0.0
  %245 = vmatprep.subr.mxu0 0.0
  %246 = vmatpush2.msra.mxu0 0.0
  %247 = vmatprep.mubr.f32.mxu0 0.0
  %248 = vmatmul.mubr.f32.gmra.mxu0 %v85
  %v249 = vpop.f32.mrf.mxu0
  %v250 = vadd.f32 %v82, %v249
  %v251 = vpop.f32.mrf.mxu0
  %v252 = vadd.f32 %v82, %v251
  %253 = vdwg.mxu0
  %254 = vmatprep.subr.mxu0 0.0
  %255 = vmatpush1.msra.mxu0 0.0
  %256 = vmatprep.subr.mxu0 0.0
  %257 = vmatpush1.msra.mxu0 0.0
  %258 = vmatprep.subr.mxu0 0.0
  %259 = vmatpush1.msra.mxu0 0.0
  %260 = vmatprep.subr.mxu0 0.0
  %261 = vmatpush1.msra.mxu0 0.0
  %262 = vmatprep.subr.mxu0 0.0
  %263 = vmatpush1.msra.mxu0 0.0
  %264 = vmatprep.subr.mxu0 0.0
  %265 = vmatpush1.msra.mxu0 0.0
  %266 = vmatprep.subr.mxu0 0.0
  %267 = vmatpush1.msra.mxu0 0.0
  %268 = vmatprep.subr.mxu0 0.0
  %269 = vmatpush1.msra.mxu0 0.0
  %270 = vmatprep.subr.mxu0 0.0
  %271 = vmatpush1.msra.mxu0 0.0
  %272 = vmatprep.subr.mxu0 %v104
  %273 = vmatpush1.msra.mxu0 %v101
  %274 = vmatprep.subr.mxu0 %v62
  %275 = vmatpush1.msra.mxu0 %v61
  %276 = vmatprep.subr.mxu0 %v54
  %277 = vmatpush1.msra.mxu0 %v53
  %278 = vmatprep.subr.mxu0 %v46
  %279 = vmatpush1.msra.mxu0 %v45
  %280 = vmatprep.subr.mxu0 %v38
  %281 = vmatpush1.msra.mxu0 %v37
  %282 = vmatprep.subr.mxu0 %v30
  %283 = vmatpush1.msra.mxu0 %v29
  %284 = vmatprep.subr.mxu0 %v22
  %285 = vmatpush1.msra.mxu0 %v21
  %286 = vmatprep.subr.mxu0 0.0
  %287 = vmatpush2.msra.mxu0 0.0
  %288 = vmatprep.subr.mxu0 0.0
  %289 = vmatpush2.msra.mxu0 0.0
  %290 = vmatprep.subr.mxu0 0.0
  %291 = vmatpush2.msra.mxu0 0.0
  %292 = vmatprep.subr.mxu0 0.0
  %293 = vmatpush2.msra.mxu0 0.0
  %294 = vmatprep.subr.mxu0 0.0
  %295 = vmatpush2.msra.mxu0 0.0
  %296 = vmatprep.subr.mxu0 0.0
  %297 = vmatpush2.msra.mxu0 0.0
  %298 = vmatprep.subr.mxu0 0.0
  %299 = vmatpush2.msra.mxu0 0.0
  %300 = vmatprep.subr.mxu0 0.0
  %301 = vmatpush2.msra.mxu0 0.0
  %302 = vmatprep.subr.mxu0 0.0
  %303 = vmatpush2.msra.mxu0 0.0
  %304 = vmatprep.subr.mxu0 0.0
  %305 = vmatpush2.msra.mxu0 0.0
  %306 = vmatprep.subr.mxu0 0.0
  %307 = vmatpush2.msra.mxu0 0.0
  %308 = vmatprep.subr.mxu0 0.0
  %309 = vmatpush2.msra.mxu0 0.0
  %310 = vmatprep.subr.mxu0 0.0
  %311 = vmatpush2.msra.mxu0 0.0
  %312 = vmatprep.subr.mxu0 0.0
  %313 = vmatpush2.msra.mxu0 0.0
  %314 = vmatprep.subr.mxu0 0.0
  %315 = vmatpush2.msra.mxu0 0.0
  %316 = vmatprep.subr.mxu0 0.0
  %317 = vmatpush2.msra.mxu0 0.0
  %318 = vmatprep.mubr.f32.mxu0 0.0
  %319 = vmatmul.mubr.f32.gmra.mxu0 %v85
  %v320 = vpop.f32.mrf.mxu0
  %v321 = vadd.f32 %v82, %v320
  %v322 = vpop.f32.mrf.mxu0
  %v323 = vadd.f32 %v82, %v322
  %324 = vdwg.mxu0
  %325 = vmatprep.subr.mxu0 0.0
  %326 = vmatpush1.msra.mxu0 0.0
  %327 = vmatprep.subr.mxu0 0.0
  %328 = vmatpush1.msra.mxu0 0.0
  %329 = vmatprep.subr.mxu0 0.0
  %330 = vmatpush1.msra.mxu0 0.0
  %331 = vmatprep.subr.mxu0 0.0
  %332 = vmatpush1.msra.mxu0 0.0
  %333 = vmatprep.subr.mxu0 0.0
  %334 = vmatpush1.msra.mxu0 0.0
  %335 = vmatprep.subr.mxu0 0.0
  %336 = vmatpush1.msra.mxu0 0.0
  %337 = vmatprep.subr.mxu0 0.0
  %338 = vmatpush1.msra.mxu0 0.0
  %339 = vmatprep.subr.mxu0 0.0
  %340 = vmatpush1.msra.mxu0 0.0
  %341 = vmatprep.subr.mxu0 0.0
  %342 = vmatpush1.msra.mxu0 0.0
  %343 = vmatprep.subr.mxu0 %v110
  %344 = vmatpush1.msra.mxu0 %v107
  %345 = vmatprep.subr.mxu0 %v64
  %346 = vmatpush1.msra.mxu0 %v63
  %347 = vmatprep.subr.mxu0 %v56
  %348 = vmatpush1.msra.mxu0 %v55
  %349 = vmatprep.subr.mxu0 %v48
  %350 = vmatpush1.msra.mxu0 %v47
  %351 = vmatprep.subr.mxu0 %v40
  %352 = vmatpush1.msra.mxu0 %v39
  %353 = vmatprep.subr.mxu0 %v32
  %354 = vmatpush1.msra.mxu0 %v31
  %355 = vmatprep.subr.mxu0 %v24
  %356 = vmatpush1.msra.mxu0 %v23
  %357 = vmatprep.subr.mxu0 0.0
  %358 = vmatpush2.msra.mxu0 0.0
  %359 = vmatprep.subr.mxu0 0.0
  %360 = vmatpush2.msra.mxu0 0.0
  %361 = vmatprep.subr.mxu0 0.0
  %362 = vmatpush2.msra.mxu0 0.0
  %363 = vmatprep.subr.mxu0 0.0
  %364 = vmatpush2.msra.mxu0 0.0
  %365 = vmatprep.subr.mxu0 0.0
  %366 = vmatpush2.msra.mxu0 0.0
  %367 = vmatprep.subr.mxu0 0.0
  %368 = vmatpush2.msra.mxu0 0.0
  %369 = vmatprep.subr.mxu0 0.0
  %370 = vmatpush2.msra.mxu0 0.0
  %371 = vmatprep.subr.mxu0 0.0
  %372 = vmatpush2.msra.mxu0 0.0
  %373 = vmatprep.subr.mxu0 0.0
  %374 = vmatpush2.msra.mxu0 0.0
  %375 = vmatprep.subr.mxu0 0.0
  %376 = vmatpush2.msra.mxu0 0.0
  %377 = vmatprep.subr.mxu0 0.0
  %378 = vmatpush2.msra.mxu0 0.0
  %379 = vmatprep.subr.mxu0 0.0
  %380 = vmatpush2.msra.mxu0 0.0
  %381 = vmatprep.subr.mxu0 0.0
  %382 = vmatpush2.msra.mxu0 0.0
  %383 = vmatprep.subr.mxu0 0.0
  %384 = vmatpush2.msra.mxu0 0.0
  %385 = vmatprep.subr.mxu0 0.0
  %386 = vmatpush2.msra.mxu0 0.0
  %387 = vmatprep.subr.mxu0 0.0
  %388 = vmatpush2.msra.mxu0 0.0
  %389 = vmatprep.mubr.f32.mxu0 0.0
  %390 = vmatmul.mubr.f32.gmra.mxu0 %v85
  %v391 = vpop.f32.mrf.mxu0
  %v392 = vadd.f32 %v82, %v391
  %v393 = vpop.f32.mrf.mxu0
  %v394 = vadd.f32 %v82, %v393
  %395 = vdwg.mxu0
  %v396 = vmax.f32 %v179, 0.0
  %v397 = vmax.f32 %v181, 0.0
  %v398 = vmax.f32 %v250, 0.0
  %v399 = vmax.f32 %v252, 0.0
  %v400 = vmax.f32 %v321, 0.0
  %v401 = vmax.f32 %v323, 0.0
  %v402 = vmax.f32 %v392, 0.0
  %v403 = vmax.f32 %v394, 0.0
  %v412 = vcombine.low %v396, %v397
  %v413 = vcombine.low %v398, %v399
  %v414 = vcombine.low %v400, %v401
  %v415 = vcombine.low %v402, %v403
  %v417 = vunpack.c.l.s4 1966171168
  %v418 = vunpack.c.0.s8 %v417
  %v419 = vlaneseq
  %v420 = vshrl.u32 %v419, 7
  %v421 = vsub.s32 %v418, %v420
  %v422 = vrot.slane %v412, %v421
  %v424 = vunpack.c.l.s4 1966171168
  %v425 = vunpack.c.0.s8 %v424
  %v426 = vlaneseq
  %v427 = vshrl.u32 %v426, 7
  %v428 = vsub.s32 %v425, %v427
  %v429 = vrot.slane %v413, %v428
  %v431 = vunpack.c.l.s4 1966171168
  %v432 = vunpack.c.0.s8 %v431
  %v433 = vlaneseq
  %v434 = vshrl.u32 %v433, 7
  %v435 = vsub.s32 %v432, %v434
  %v436 = vrot.slane %v414, %v435
  %v438 = vunpack.c.l.s4 1966171168
  %v439 = vunpack.c.0.s8 %v438
  %v440 = vlaneseq
  %v441 = vshrl.u32 %v440, 7
  %v442 = vsub.s32 %v439, %v441
  %v443 = vrot.slane %v415, %v442
  %v444 = vcombine.low %v422, %v429
  %v445 = vcombine.low %v436, %v443
  %v447 = vunpack.c.l.s4 1966171168
  %v448 = vunpack.c.0.s8 %v447
  %v449 = vlaneseq
  %v450 = vshrl.u32 %v449, 7
  %v451 = vsub.s32 %v448, %v450
  %v452 = vrot.slane %v444, %v451
  %v454 = vunpack.c.l.s4 1966171168
  %v455 = vunpack.c.0.s8 %v454
  %v456 = vlaneseq
  %v457 = vshrl.u32 %v456, 7
  %v458 = vsub.s32 %v455, %v457
  %v459 = vrot.slane %v445, %v458
  %v460 = vcombine.low %v452, %v459
  %462 = vst [vmem:[%s3] sm:$0xff] %v460
  // Predicated region
  $region14: #{riabnet_forward.21} parent=0 // pred_check
    _
  $region15: #{riabnet_forward.21} parent=0 // pred_check_branch
    %464 = sbr.rel (0) target = $region17
  $region16: #{riabnet_forward.21} parent=0 // pred_region
    _
  $region17: #{riabnet_forward.21} parent=0 // pred_fallthru
    _
  // Predicated region
  $region18: #{riabnet_forward.21} parent=0 // pred_check
    _
  $region19: #{riabnet_forward.21} parent=0 // pred_check_branch
    %466 = sbr.rel (0) target = $region21
  $region20: #{riabnet_forward.21} parent=0 // pred_region
    _
  $region21: #{riabnet_forward.21} parent=0 // pred_fallthru
    _

</llo_original>
